<compile_context>
chip_gen: v7x
topology: tpu7x:2x2x1
jax: 0.10.0
libtpu: 0.0.40
codegen_flags: <defaults>
</compile_context>

<pallas_src>
import jax
import jax.numpy as jnp
from jax import lax
from jax.experimental import pallas as pl
from jax.experimental.pallas import tpu as pltpu

NEG_SLOPE = 0.01            # nn.LeakyReLU() default
BN_EPS = 1e-5               # nn.BatchNorm2d default eps
MXU_DTYPE = jnp.bfloat16    # MXU operand dtype (accumulation stays f32)


def _leaky_relu(x):
    return jnp.where(x >= 0, x, NEG_SLOPE * x)


def _banded_conv_weights(w_oihw, width, dtype):
    """OIHW 3x3 conv weights -> (3, W*Cin, W*Cout) banded (Toeplitz) matrices.

    T[kh, w_in*Cin + ci, w_out*Cout + co] = w[co, ci, kh, w_in - w_out + 1]
    (zero outside the 3-tap band), so the row-slab matmul
        out_rows[h] = sum_kh x_rows[h + kh - 1] @ T[kh]
    is exactly the 3x3 / stride-1 / pad-1 convolution.  W zero-padding is
    encoded in the band; H padding is handled by zero halo rows in VMEM.
    """
    w = jnp.transpose(w_oihw, (2, 3, 1, 0)).astype(jnp.float32)   # (kh, kw, ci, co)
    cin, cout = w.shape[2], w.shape[3]
    w_in = jnp.arange(width)[:, None]
    w_out = jnp.arange(width)[None, :]
    kw = w_in - w_out + 1                                          # (W, W)
    valid = (kw >= 0) & (kw <= 2)
    t = w[:, jnp.clip(kw, 0, 2)]                                   # (3, W, W, ci, co)
    t = jnp.where(valid[None, :, :, None, None], t, 0.0)
    t = jnp.transpose(t, (0, 1, 3, 2, 4))                          # (3, W, ci, W, co)
    return t.reshape(3, width * cin, width * cout).astype(dtype)


def _pick_tile_n(n, h, target_rows=256):
    """Largest divisor of n with tile_n*h <= target_rows (MXU M-fill)."""
    best = 1
    for t in range(1, n + 1):
        if n % t == 0 and t * h <= target_rows:
            best = t
    return best


def _pick_bn_rows(total_rows, target=1024):
    """Largest row-block for the BN pass: multiple of 8, divides total, <= target."""
    best = total_rows
    for r in range(8, min(total_rows, target) + 1, 8):
        if total_rows % r == 0:
            best = r
    return best


def _make_conv_stats_kernel(tile_n, H, WCIN, WCOUT):
    TH = tile_n * H

    def kernel(x_ref, t1_ref, t2_ref, z2_ref, sum_ref, ssq_ref, xp_ref, y1p_ref):
        # Zero only the H-halo rows (top/bottom of every image); interior rows
        # are fully overwritten each step, so there is no cross-step scratch
        # dependence and the tile axis can be safely "parallel".
        xp_ref[:, 0:1, :] = jnp.zeros((tile_n, 1, WCIN), xp_ref.dtype)
        xp_ref[:, H + 1:H + 2, :] = jnp.zeros((tile_n, 1, WCIN), xp_ref.dtype)
        y1p_ref[:, 0:1, :] = jnp.zeros((tile_n, 1, WCOUT), y1p_ref.dtype)
        y1p_ref[:, H + 1:H + 2, :] = jnp.zeros((tile_n, 1, WCOUT), y1p_ref.dtype)

        # In-kernel zero padding along H (W padding is encoded in t1/t2).
        # TODO(synk): on v5e this VMEM->VMEM copy can be removed by taking x
        # with memory_space=pl.ANY and DMA-ing the HBM tile straight into
        # xp_ref[:, 1:H+1, :] (relieves the single vector-store slot).
        xp_ref[:, 1:H + 1, :] = x_ref[...]

        def conv3x3(src_ref, t_ref, k_width):
            # One banded matmul per kernel row kh (K = W*C), bf16 operands,
            # f32 accumulation on the MXU.
            # NOTE: with tile_n > 1 the sliced-middle-dim reshape materializes
            # a small copy; tile_n > 1 is only picked when H is small, so the
            # copy is a few KiB.  (With tile_n == 1 it is a free squeeze.)
            z = jnp.dot(src_ref[:, 0:H, :].reshape(TH, k_width), t_ref[0],
                        preferred_element_type=jnp.float32)
            for kh in (1, 2):
                z = z + jnp.dot(src_ref[:, kh:kh + H, :].reshape(TH, k_width),
                                t_ref[kh], preferred_element_type=jnp.float32)
            return z

        # conv1 -> LeakyReLU; the intermediate stays in VMEM (bf16), never HBM.
        z1 = conv3x3(xp_ref, t1_ref, WCIN)                     # (TH, W*Cout) f32
        y1p_ref[:, 1:H + 1, :] = (
            _leaky_relu(z1).astype(y1p_ref.dtype).reshape(tile_n, H, WCOUT))

        # conv2 (pre-BatchNorm activation).
        z2 = conv3x3(y1p_ref, t2_ref, WCOUT)                   # (TH, W*Cout) f32

        # Emit z2 once plus per-tile first/second moments; BN is finalized
        # outside and applied by a tiny elementwise pass (no conv recompute).
        z2_ref[...] = z2
        s = jnp.sum(z2, axis=0, keepdims=True)                 # (1, W*Cout) f32
        q = jnp.sum(z2 * z2, axis=0, keepdims=True)
        sum_ref[...] = jnp.broadcast_to(s, (8, WCOUT))
        ssq_ref[...] = jnp.broadcast_to(q, (8, WCOUT))

    return kernel


def _bn_act_kernel(z2_ref, scale_ref, shift_ref, out_ref):
    # Lane-dense elementwise: out = LeakyReLU(z2 * scale + shift).
    out_ref[...] = _leaky_relu(z2_ref[...] * scale_ref[...] + shift_ref[...])


def conv2d_double_block(x_nchw, w1_oihw, w2_oihw, gamma, beta, *, tile_n=None):
    """Forward pass of Conv2dDoubleBlock (NCHW in / NCHW out, float32)."""
    N, Cin, H, W = x_nchw.shape
    Cout = w1_oihw.shape[0]
    WCIN, WCOUT = W * Cin, W * Cout
    if tile_n is None:
        tile_n = _pick_tile_n(N, H)
    assert N % tile_n == 0
    T = N // tile_n
    TH = tile_n * H
    inv_count = 1.0 / float(N * H * W)     # BatchNorm averages over (N, H, W)

    # ---- host-side operand prep (tiny, one-time per call) -------------------
    # NCHW -> (N, H, W*Cin): channels folded onto the lane axis (lane-dense),
    # cast once to the bf16 MXU operand dtype.
    # TODO(synk): if the consumer accepts NHWC / (N, H, W*C) activations, drop
    # this transpose (and the output one) to save an HBM round-trip each.
    x3d = jnp.transpose(x_nchw, (0, 2, 3, 1)).reshape(N, H, WCIN).astype(MXU_DTYPE)
    t1 = _banded_conv_weights(w1_oihw, W, MXU_DTYPE)           # (3, W*Cin,  W*Cout)
    t2 = _banded_conv_weights(w2_oihw, W, MXU_DTYPE)           # (3, W*Cout, W*Cout)

    # TODO(synk): for large W*C the banded weights grow as (W*C)^2 — add
    # W-tiling (block-banded weights) or fall back to per-tap K=Cin matmuls
    # once 2*(|t1|+|t2|) approaches ~40 MiB (binds first on v7x's 64 MiB VMEM).
    # TODO(synk): mark t1/t2 with pipeline_mode=pl.Buffered(1); they are
    # grid-invariant, so double-buffering them is wasted VMEM.

    # ---- pass A: conv1 -> LeakyReLU -> conv2, plus per-tile BN partials -----
    kernel_a = _make_conv_stats_kernel(tile_n, H, WCIN, WCOUT)
    z2, tile_sum, tile_ssq = pl.pallas_call(
        kernel_a,
        out_shape=(
            jax.ShapeDtypeStruct((N * H, WCOUT), jnp.float32),  # pre-BN conv2 out
            jax.ShapeDtypeStruct((8 * T, WCOUT), jnp.float32),  # per-tile sum
            jax.ShapeDtypeStruct((8 * T, WCOUT), jnp.float32),  # per-tile sum sq
        ),
        grid_spec=pltpu.PrefetchScalarGridSpec(
            num_scalar_prefetch=0,
            grid=(T,),
            in_specs=[
                pl.BlockSpec((tile_n, H, WCIN), lambda t: (t, 0, 0)),
                pl.BlockSpec((3, WCIN, WCOUT), lambda t: (0, 0, 0)),
                pl.BlockSpec((3, WCOUT, WCOUT), lambda t: (0, 0, 0)),
            ],
            out_specs=[
                pl.BlockSpec((TH, WCOUT), lambda t: (t, 0)),
                pl.BlockSpec((8, WCOUT), lambda t: (t, 0)),
                pl.BlockSpec((8, WCOUT), lambda t: (t, 0)),
            ],
            scratch_shapes=[
                pltpu.VMEM((tile_n, H + 2, WCIN), MXU_DTYPE),   # H-padded x tile
                pltpu.VMEM((tile_n, H + 2, WCOUT), MXU_DTYPE),  # H-padded conv1 out
            ],
        ),
        compiler_params=pltpu.CompilerParams(
            # Per-tile independent work -> shardable across v7x's 2 TensorCores.
            dimension_semantics=("parallel",),
            # <= 48 MiB is safe on v7x (64 MiB physical); v5e/v6e have headroom.
            vmem_limit_bytes=48 * 1024 * 1024,
        ),
    )(x3d, t1, t2)

    # ---- finalize BatchNorm statistics once (tiny per-channel arrays) -------
    # f32 E[x^2] - mean^2 with a clamp; values are pre-activation conv outputs
    # with near-zero mean, so cancellation is not a concern here.
    # TODO(synk): switch to a shifted / Welford accumulation if activations
    # ever carry a large common mean.
    sum_w = jnp.sum(tile_sum.reshape(T, 8, WCOUT)[:, 0, :], axis=0)     # (W*Cout,)
    ssq_w = jnp.sum(tile_ssq.reshape(T, 8, WCOUT)[:, 0, :], axis=0)
    ch_sum = jnp.sum(sum_w.reshape(W, Cout), axis=0)                    # (Cout,)
    ch_ssq = jnp.sum(ssq_w.reshape(W, Cout), axis=0)
    mean = ch_sum * inv_count
    var = jnp.maximum(ch_ssq * inv_count - mean * mean, 0.0)            # biased var
    scale_c = gamma.astype(jnp.float32) * lax.rsqrt(var + BN_EPS)
    shift_c = beta.astype(jnp.float32) - mean * scale_c
    # Broadcast per-channel affine onto the folded (w, c) lane layout.
    scale_w = jnp.tile(scale_c, W).reshape(1, WCOUT)
    shift_w = jnp.tile(shift_c, W).reshape(1, WCOUT)

    # ---- pass B: apply BN affine + LeakyReLU (lane-dense elementwise) -------
    # TODO(synk): z2 could be stored/read in bf16 to halve its HBM traffic.
    rows_b = _pick_bn_rows(N * H)
    out2d = pl.pallas_call(
        _bn_act_kernel,
        out_shape=jax.ShapeDtypeStruct((N * H, WCOUT), jnp.float32),
        grid_spec=pltpu.PrefetchScalarGridSpec(
            num_scalar_prefetch=0,
            grid=(N * H // rows_b,),
            in_specs=[
                pl.BlockSpec((rows_b, WCOUT), lambda i: (i, 0)),
                pl.BlockSpec((1, WCOUT), lambda i: (0, 0)),
                pl.BlockSpec((1, WCOUT), lambda i: (0, 0)),
            ],
            out_specs=pl.BlockSpec((rows_b, WCOUT), lambda i: (i, 0)),
        ),
        compiler_params=pltpu.CompilerParams(
            dimension_semantics=("parallel",),
            vmem_limit_bytes=48 * 1024 * 1024,
        ),
    )(z2, scale_w, shift_w)

    # (N*H, W*Cout) -> NCHW (wrapper-side layout plumbing only)
    return jnp.transpose(out2d.reshape(N, H, W, Cout), (0, 3, 1, 2))


def reference(x_nchw, w1_oihw, w2_oihw, gamma, beta):
    """Pure-JAX reference mirroring the PyTorch forward (training-mode BN)."""
    dn = ("NCHW", "OIHW", "NCHW")
    y = lax.conv_general_dilated(x_nchw, w1_oihw, (1, 1), ((1, 1), (1, 1)),
                                 dimension_numbers=dn)
    y = jnp.where(y >= 0, y, NEG_SLOPE * y)
    z = lax.conv_general_dilated(y, w2_oihw, (1, 1), ((1, 1), (1, 1)),
                                 dimension_numbers=dn)
    mean = jnp.mean(z, axis=(0, 2, 3), keepdims=True)
    var = jnp.mean((z - mean) ** 2, axis=(0, 2, 3), keepdims=True)
    z = (z - mean) * lax.rsqrt(var + BN_EPS)
    z = z * gamma.reshape(1, -1, 1, 1) + beta.reshape(1, -1, 1, 1)
    return jnp.where(z >= 0, z, NEG_SLOPE * z)


if __name__ == "__main__":
    # Small shapes: batch=2, in_channels=4, out_channels=8, spatial=16x16.
    N, Cin, Cout, H, W = 2, 4, 8, 16, 16
    key = jax.random.PRNGKey(0)
    kx, kw1, kw2, kg, kb = jax.random.split(key, 5)

    x = jax.random.normal(kx, (N, Cin, H, W), dtype=jnp.float32)
    w1 = jax.random.normal(kw1, (Cout, Cin, 3, 3), dtype=jnp.float32) * 0.1
    w2 = jax.random.normal(kw2, (Cout, Cout, 3, 3), dtype=jnp.float32) * 0.1
    # BatchNorm2d affine params (non-trivial values to exercise the path).
    gamma = 1.0 + 0.1 * jax.random.normal(kg, (Cout,), dtype=jnp.float32)
    beta = 0.1 * jax.random.normal(kb, (Cout,), dtype=jnp.float32)

    fwd = jax.jit(conv2d_double_block)
    out = jax.block_until_ready(fwd(x, w1, w2, gamma, beta))
    ref = jax.block_until_ready(reference(x, w1, w2, gamma, beta))

    assert out.shape == (N, Cout, H, W), out.shape
    err = float(jnp.max(jnp.abs(out - ref)))
    # bf16 MXU operands (f32 accumulation) => tolerance loosened vs. pure f32.
    assert err < 7.5e-2, err
    print("KERNEL_OK")
</pallas_src>

<mosaic_0001>
module attributes {stable_mosaic.version = 11 : i64} {
  func.func @kernel(%arg0: i32, %arg1: memref<2x16x64xbf16, #tpu.memory_space<vmem>>, %arg2: memref<3x64x128xbf16, #tpu.memory_space<vmem>>, %arg3: memref<3x128x128xbf16, #tpu.memory_space<vmem>>, %arg4: memref<32x128xf32, #tpu.memory_space<vmem>>, %arg5: memref<8x128xf32, #tpu.memory_space<vmem>>, %arg6: memref<8x128xf32, #tpu.memory_space<vmem>>, %arg7: memref<2x18x64xbf16, #tpu.memory_space<vmem>>, %arg8: memref<2x18x128xbf16, #tpu.memory_space<vmem>>) attributes {dimension_semantics = [#tpu.dimension_semantics<parallel>], iteration_bounds = array<i64: 1>, scalar_prefetch = 0 : i64, scratch_operands = 2 : i64, tpu.core_type = #tpu.core_type<tc>, window_params = [{transform_indices = @transform_0, window_bounds = array<i64: 2, 16, 64>}, {pipeline_mode = #tpu.pipeline_mode<synchronous>, transform_indices = @transform_1, window_bounds = array<i64: 3, 64, 128>}, {pipeline_mode = #tpu.pipeline_mode<synchronous>, transform_indices = @transform_2, window_bounds = array<i64: 3, 128, 128>}, {transform_indices = @transform_3, window_bounds = array<i64: 32, 128>}, {transform_indices = @transform_4, window_bounds = array<i64: 8, 128>}, {transform_indices = @transform_5, window_bounds = array<i64: 8, 128>}]} {
    %cst = arith.constant 0.000000e+00 : bf16
    %0 = vector.broadcast %cst : bf16 to vector<2x1x64xbf16>
    %c0 = arith.constant 0 : index
    %c0_0 = arith.constant 0 : index
    %c0_1 = arith.constant 0 : index
    %1 = vector.load %arg7[%c0, %c0_0, %c0_1] : memref<2x18x64xbf16, #tpu.memory_space<vmem>>, vector<2x1x64xbf16>
    tpu.vector_store %arg7[%c0, %c0_0, %c0_1], %0 {strides = array<i32>} : memref<2x18x64xbf16, #tpu.memory_space<vmem>>, vector<2x1x64xbf16>,
    %cst_2 = arith.constant 0.000000e+00 : bf16
    %2 = vector.broadcast %cst_2 : bf16 to vector<2x1x64xbf16>
    %c0_3 = arith.constant 0 : index
    %c17 = arith.constant 17 : index
    %c0_4 = arith.constant 0 : index
    %3 = vector.load %arg7[%c0_3, %c17, %c0_4] : memref<2x18x64xbf16, #tpu.memory_space<vmem>>, vector<2x1x64xbf16>
    tpu.vector_store %arg7[%c0_3, %c17, %c0_4], %2 {strides = array<i32>} : memref<2x18x64xbf16, #tpu.memory_space<vmem>>, vector<2x1x64xbf16>,
    %cst_5 = arith.constant 0.000000e+00 : bf16
    %4 = vector.broadcast %cst_5 : bf16 to vector<2x1x128xbf16>
    %c0_6 = arith.constant 0 : index
    %c0_7 = arith.constant 0 : index
    %c0_8 = arith.constant 0 : index
    %5 = vector.load %arg8[%c0_6, %c0_7, %c0_8] : memref<2x18x128xbf16, #tpu.memory_space<vmem>>, vector<2x1x128xbf16>
    tpu.vector_store %arg8[%c0_6, %c0_7, %c0_8], %4 {strides = array<i32>} : memref<2x18x128xbf16, #tpu.memory_space<vmem>>, vector<2x1x128xbf16>,
    %cst_9 = arith.constant 0.000000e+00 : bf16
    %6 = vector.broadcast %cst_9 : bf16 to vector<2x1x128xbf16>
    %c0_10 = arith.constant 0 : index
    %c17_11 = arith.constant 17 : index
    %c0_12 = arith.constant 0 : index
    %7 = vector.load %arg8[%c0_10, %c17_11, %c0_12] : memref<2x18x128xbf16, #tpu.memory_space<vmem>>, vector<2x1x128xbf16>
    tpu.vector_store %arg8[%c0_10, %c17_11, %c0_12], %6 {strides = array<i32>} : memref<2x18x128xbf16, #tpu.memory_space<vmem>>, vector<2x1x128xbf16>,
    %c0_13 = arith.constant 0 : index
    %c0_14 = arith.constant 0 : index
    %c0_15 = arith.constant 0 : index
    %8 = vector.load %arg1[%c0_13, %c0_14, %c0_15] : memref<2x16x64xbf16, #tpu.memory_space<vmem>>, vector<2x16x64xbf16>
    %c0_16 = arith.constant 0 : index
    %c1 = arith.constant 1 : index
    %c0_17 = arith.constant 0 : index
    %9 = vector.load %arg7[%c0_16, %c1, %c0_17] : memref<2x18x64xbf16, #tpu.memory_space<vmem>>, vector<2x16x64xbf16>
    tpu.vector_store %arg7[%c0_16, %c1, %c0_17], %8 {strides = array<i32>} : memref<2x18x64xbf16, #tpu.memory_space<vmem>>, vector<2x16x64xbf16>,
    %c0_18 = arith.constant 0 : index
    %c0_19 = arith.constant 0 : index
    %c0_20 = arith.constant 0 : index
    %10 = vector.load %arg7[%c0_18, %c0_19, %c0_20] : memref<2x18x64xbf16, #tpu.memory_space<vmem>>, vector<2x16x64xbf16>
    %11 = vector.shape_cast %10 : vector<2x16x64xbf16> to vector<32x64xbf16>
    %c0_21 = arith.constant 0 : index
    %c0_22 = arith.constant 0 : index
    %c0_23 = arith.constant 0 : index
    %12 = vector.load %arg2[%c0_21, %c0_22, %c0_23] : memref<3x64x128xbf16, #tpu.memory_space<vmem>>, vector<1x64x128xbf16>
    %13 = vector.shape_cast %12 : vector<1x64x128xbf16> to vector<64x128xbf16>
    %cst_24 = arith.constant dense<0.000000e+00> : vector<32x128xf32>
    %14 = tpu.matmul %11, %13, %cst_24 {dimension_numbers = #tpu.dot_dimension_numbers<[1], [0], [0], [1], [0, 0, 1, 1], [], []>} : vector<32x64xbf16>, vector<64x128xbf16>, vector<32x128xf32> -> vector<32x128xf32>
    %c0_25 = arith.constant 0 : index
    %c1_26 = arith.constant 1 : index
    %c0_27 = arith.constant 0 : index
    %15 = vector.load %arg7[%c0_25, %c1_26, %c0_27] : memref<2x18x64xbf16, #tpu.memory_space<vmem>>, vector<2x16x64xbf16>
    %16 = vector.shape_cast %15 : vector<2x16x64xbf16> to vector<32x64xbf16>
    %c1_28 = arith.constant 1 : index
    %c0_29 = arith.constant 0 : index
    %c0_30 = arith.constant 0 : index
    %17 = vector.load %arg2[%c1_28, %c0_29, %c0_30] : memref<3x64x128xbf16, #tpu.memory_space<vmem>>, vector<1x64x128xbf16>
    %18 = vector.shape_cast %17 : vector<1x64x128xbf16> to vector<64x128xbf16>
    %cst_31 = arith.constant dense<0.000000e+00> : vector<32x128xf32>
    %19 = tpu.matmul %16, %18, %cst_31 {dimension_numbers = #tpu.dot_dimension_numbers<[1], [0], [0], [1], [0, 0, 1, 1], [], []>} : vector<32x64xbf16>, vector<64x128xbf16>, vector<32x128xf32> -> vector<32x128xf32>
    %20 = arith.addf %14, %19 : vector<32x128xf32>
    %c0_32 = arith.constant 0 : index
    %c2 = arith.constant 2 : index
    %c0_33 = arith.constant 0 : index
    %21 = vector.load %arg7[%c0_32, %c2, %c0_33] : memref<2x18x64xbf16, #tpu.memory_space<vmem>>, vector<2x16x64xbf16>
    %22 = vector.shape_cast %21 : vector<2x16x64xbf16> to vector<32x64xbf16>
    %c2_34 = arith.constant 2 : index
    %c0_35 = arith.constant 0 : index
    %c0_36 = arith.constant 0 : index
    %23 = vector.load %arg2[%c2_34, %c0_35, %c0_36] : memref<3x64x128xbf16, #tpu.memory_space<vmem>>, vector<1x64x128xbf16>
    %24 = vector.shape_cast %23 : vector<1x64x128xbf16> to vector<64x128xbf16>
    %cst_37 = arith.constant dense<0.000000e+00> : vector<32x128xf32>
    %25 = tpu.matmul %22, %24, %cst_37 {dimension_numbers = #tpu.dot_dimension_numbers<[1], [0], [0], [1], [0, 0, 1, 1], [], []>} : vector<32x64xbf16>, vector<64x128xbf16>, vector<32x128xf32> -> vector<32x128xf32>
    %26 = arith.addf %20, %25 : vector<32x128xf32>
    %cst_38 = arith.constant 0.000000e+00 : f32
    %27 = vector.broadcast %cst_38 : f32 to vector<32x128xf32>
    %28 = arith.cmpf oge, %26, %27 : vector<32x128xf32>
    %cst_39 = arith.constant 0.00999999977 : f32
    %29 = vector.broadcast %cst_39 : f32 to vector<32x128xf32>
    %30 = arith.mulf %29, %26 : vector<32x128xf32>
    %31 = arith.select %28, %26, %30 : vector<32x128xi1>, vector<32x128xf32>
    %32 = arith.truncf %31 : vector<32x128xf32> to vector<32x128xbf16>
    %33 = vector.shape_cast %32 : vector<32x128xbf16> to vector<2x16x128xbf16>
    %c0_40 = arith.constant 0 : index
    %c1_41 = arith.constant 1 : index
    %c0_42 = arith.constant 0 : index
    %34 = vector.load %arg8[%c0_40, %c1_41, %c0_42] : memref<2x18x128xbf16, #tpu.memory_space<vmem>>, vector<2x16x128xbf16>
    tpu.vector_store %arg8[%c0_40, %c1_41, %c0_42], %33 {strides = array<i32>} : memref<2x18x128xbf16, #tpu.memory_space<vmem>>, vector<2x16x128xbf16>,
    %c0_43 = arith.constant 0 : index
    %c0_44 = arith.constant 0 : index
    %c0_45 = arith.constant 0 : index
    %35 = vector.load %arg8[%c0_43, %c0_44, %c0_45] : memref<2x18x128xbf16, #tpu.memory_space<vmem>>, vector<2x16x128xbf16>
    %36 = vector.shape_cast %35 : vector<2x16x128xbf16> to vector<32x128xbf16>
    %c0_46 = arith.constant 0 : index
    %c0_47 = arith.constant 0 : index
    %c0_48 = arith.constant 0 : index
    %37 = vector.load %arg3[%c0_46, %c0_47, %c0_48] : memref<3x128x128xbf16, #tpu.memory_space<vmem>>, vector<1x128x128xbf16>
    %38 = vector.shape_cast %37 : vector<1x128x128xbf16> to vector<128x128xbf16>
    %cst_49 = arith.constant dense<0.000000e+00> : vector<32x128xf32>
    %39 = tpu.matmul %36, %38, %cst_49 {dimension_numbers = #tpu.dot_dimension_numbers<[1], [0], [0], [1], [0, 0, 1, 1], [], []>} : vector<32x128xbf16>, vector<128x128xbf16>, vector<32x128xf32> -> vector<32x128xf32>
    %c0_50 = arith.constant 0 : index
    %c1_51 = arith.constant 1 : index
    %c0_52 = arith.constant 0 : index
    %40 = vector.load %arg8[%c0_50, %c1_51, %c0_52] : memref<2x18x128xbf16, #tpu.memory_space<vmem>>, vector<2x16x128xbf16>
    %41 = vector.shape_cast %40 : vector<2x16x128xbf16> to vector<32x128xbf16>
    %c1_53 = arith.constant 1 : index
    %c0_54 = arith.constant 0 : index
    %c0_55 = arith.constant 0 : index
    %42 = vector.load %arg3[%c1_53, %c0_54, %c0_55] : memref<3x128x128xbf16, #tpu.memory_space<vmem>>, vector<1x128x128xbf16>
    %43 = vector.shape_cast %42 : vector<1x128x128xbf16> to vector<128x128xbf16>
    %cst_56 = arith.constant dense<0.000000e+00> : vector<32x128xf32>
    %44 = tpu.matmul %41, %43, %cst_56 {dimension_numbers = #tpu.dot_dimension_numbers<[1], [0], [0], [1], [0, 0, 1, 1], [], []>} : vector<32x128xbf16>, vector<128x128xbf16>, vector<32x128xf32> -> vector<32x128xf32>
    %45 = arith.addf %39, %44 : vector<32x128xf32>
    %c0_57 = arith.constant 0 : index
    %c2_58 = arith.constant 2 : index
    %c0_59 = arith.constant 0 : index
    %46 = vector.load %arg8[%c0_57, %c2_58, %c0_59] : memref<2x18x128xbf16, #tpu.memory_space<vmem>>, vector<2x16x128xbf16>
    %47 = vector.shape_cast %46 : vector<2x16x128xbf16> to vector<32x128xbf16>
    %c2_60 = arith.constant 2 : index
    %c0_61 = arith.constant 0 : index
    %c0_62 = arith.constant 0 : index
    %48 = vector.load %arg3[%c2_60, %c0_61, %c0_62] : memref<3x128x128xbf16, #tpu.memory_space<vmem>>, vector<1x128x128xbf16>
    %49 = vector.shape_cast %48 : vector<1x128x128xbf16> to vector<128x128xbf16>
    %cst_63 = arith.constant dense<0.000000e+00> : vector<32x128xf32>
    %50 = tpu.matmul %47, %49, %cst_63 {dimension_numbers = #tpu.dot_dimension_numbers<[1], [0], [0], [1], [0, 0, 1, 1], [], []>} : vector<32x128xbf16>, vector<128x128xbf16>, vector<32x128xf32> -> vector<32x128xf32>
    %51 = arith.addf %45, %50 : vector<32x128xf32>
    %c0_64 = arith.constant 0 : index
    %c0_65 = arith.constant 0 : index
    %52 = vector.load %arg4[%c0_64, %c0_65] : memref<32x128xf32, #tpu.memory_space<vmem>>, vector<32x128xf32>
    tpu.vector_store %arg4[%c0_64, %c0_65], %51 {strides = array<i32>} : memref<32x128xf32, #tpu.memory_space<vmem>>, vector<32x128xf32>,
    %cst_66 = arith.constant dense<0.000000e+00> : vector<128xf32>
    %53 = vector.multi_reduction <add>, %51, %cst_66 [0] : vector<32x128xf32> to vector<128xf32>
    %54 = vector.shape_cast %53 : vector<128xf32> to vector<1x128xf32>
    %55 = arith.mulf %51, %51 : vector<32x128xf32>
    %cst_67 = arith.constant dense<0.000000e+00> : vector<128xf32>
    %56 = vector.multi_reduction <add>, %55, %cst_67 [0] : vector<32x128xf32> to vector<128xf32>
    %57 = vector.shape_cast %56 : vector<128xf32> to vector<1x128xf32>
    %58 = vector.shape_cast %54 : vector<1x128xf32> to vector<1x128xf32>
    %59 = vector.broadcast %58 : vector<1x128xf32> to vector<8x128xf32>
    %c0_68 = arith.constant 0 : index
    %c0_69 = arith.constant 0 : index
    %60 = vector.load %arg5[%c0_68, %c0_69] : memref<8x128xf32, #tpu.memory_space<vmem>>, vector<8x128xf32>
    tpu.vector_store %arg5[%c0_68, %c0_69], %59 {strides = array<i32>} : memref<8x128xf32, #tpu.memory_space<vmem>>, vector<8x128xf32>,
    %61 = vector.shape_cast %57 : vector<1x128xf32> to vector<1x128xf32>
    %62 = vector.broadcast %61 : vector<1x128xf32> to vector<8x128xf32>
    %c0_70 = arith.constant 0 : index
    %c0_71 = arith.constant 0 : index
    %63 = vector.load %arg6[%c0_70, %c0_71] : memref<8x128xf32, #tpu.memory_space<vmem>>, vector<8x128xf32>
    tpu.vector_store %arg6[%c0_70, %c0_71], %62 {strides = array<i32>} : memref<8x128xf32, #tpu.memory_space<vmem>>, vector<8x128xf32>,
    return
  }
  func.func @transform_0(%arg0: i32) -> (i32, i32, i32) {
    %c0_i32 = arith.constant 0 : i32
    %c0_i32_0 = arith.constant 0 : i32
    %c0_i32_1 = arith.constant 0 : i32
    return %arg0, %c0_i32, %c0_i32_0 : i32, i32, i32
  }
  func.func @transform_1(%arg0: i32) -> (i32, i32, i32) {
    %c0_i32 = arith.constant 0 : i32
    %c0_i32_0 = arith.constant 0 : i32
    %c0_i32_1 = arith.constant 0 : i32
    %c0_i32_2 = arith.constant 0 : i32
    return %c0_i32, %c0_i32_0, %c0_i32_1 : i32, i32, i32
  }
  func.func @transform_2(%arg0: i32) -> (i32, i32, i32) {
    %c0_i32 = arith.constant 0 : i32
    %c0_i32_0 = arith.constant 0 : i32
    %c0_i32_1 = arith.constant 0 : i32
    %c0_i32_2 = arith.constant 0 : i32
    return %c0_i32, %c0_i32_0, %c0_i32_1 : i32, i32, i32
  }
  func.func @transform_3(%arg0: i32) -> (i32, i32) {
    %c0_i32 = arith.constant 0 : i32
    %c0_i32_0 = arith.constant 0 : i32
    return %arg0, %c0_i32 : i32, i32
  }
  func.func @transform_4(%arg0: i32) -> (i32, i32) {
    %c0_i32 = arith.constant 0 : i32
    %c0_i32_0 = arith.constant 0 : i32
    return %arg0, %c0_i32 : i32, i32
  }
  func.func @transform_5(%arg0: i32) -> (i32, i32) {
    %c0_i32 = arith.constant 0 : i32
    %c0_i32_0 = arith.constant 0 : i32
    return %arg0, %c0_i32 : i32, i32
  }
}

module attributes {stable_mosaic.version = 11 : i64} {
  func.func @_bn_act_kernel(%arg0: i32, %arg1: memref<32x128xf32, #tpu.memory_space<vmem>>, %arg2: memref<1x128xf32, #tpu.memory_space<vmem>>, %arg3: memref<1x128xf32, #tpu.memory_space<vmem>>, %arg4: memref<32x128xf32, #tpu.memory_space<vmem>>) attributes {dimension_semantics = [#tpu.dimension_semantics<parallel>], iteration_bounds = array<i64: 1>, scalar_prefetch = 0 : i64, scratch_operands = 0 : i64, tpu.core_type = #tpu.core_type<tc>, window_params = [{transform_indices = @transform_0, window_bounds = array<i64: 32, 128>}, {pipeline_mode = #tpu.pipeline_mode<synchronous>, transform_indices = @transform_1, window_bounds = array<i64: 1, 128>}, {pipeline_mode = #tpu.pipeline_mode<synchronous>, transform_indices = @transform_2, window_bounds = array<i64: 1, 128>}, {transform_indices = @transform_3, window_bounds = array<i64: 32, 128>}]} {
    %c0 = arith.constant 0 : index
    %c0_0 = arith.constant 0 : index
    %0 = vector.load %arg1[%c0, %c0_0] : memref<32x128xf32, #tpu.memory_space<vmem>>, vector<32x128xf32>
    %c0_1 = arith.constant 0 : index
    %c0_2 = arith.constant 0 : index
    %1 = vector.load %arg2[%c0_1, %c0_2] : memref<1x128xf32, #tpu.memory_space<vmem>>, vector<1x128xf32>
    %2 = vector.broadcast %1 : vector<1x128xf32> to vector<32x128xf32>
    %3 = arith.mulf %0, %2 : vector<32x128xf32>
    %c0_3 = arith.constant 0 : index
    %c0_4 = arith.constant 0 : index
    %4 = vector.load %arg3[%c0_3, %c0_4] : memref<1x128xf32, #tpu.memory_space<vmem>>, vector<1x128xf32>
    %5 = vector.broadcast %4 : vector<1x128xf32> to vector<32x128xf32>
    %6 = arith.addf %3, %5 : vector<32x128xf32>
    %cst = arith.constant 0.000000e+00 : f32
    %7 = vector.broadcast %cst : f32 to vector<32x128xf32>
    %8 = arith.cmpf oge, %6, %7 : vector<32x128xf32>
    %cst_5 = arith.constant 0.00999999977 : f32
    %9 = vector.broadcast %cst_5 : f32 to vector<32x128xf32>
    %10 = arith.mulf %9, %6 : vector<32x128xf32>
    %11 = arith.select %8, %6, %10 : vector<32x128xi1>, vector<32x128xf32>
    %c0_6 = arith.constant 0 : index
    %c0_7 = arith.constant 0 : index
    %12 = vector.load %arg4[%c0_6, %c0_7] : memref<32x128xf32, #tpu.memory_space<vmem>>, vector<32x128xf32>
    tpu.vector_store %arg4[%c0_6, %c0_7], %11 {strides = array<i32>} : memref<32x128xf32, #tpu.memory_space<vmem>>, vector<32x128xf32>,
    return
  }
  func.func @transform_0(%arg0: i32) -> (i32, i32) {
    %c0_i32 = arith.constant 0 : i32
    %c0_i32_0 = arith.constant 0 : i32
    return %arg0, %c0_i32 : i32, i32
  }
  func.func @transform_1(%arg0: i32) -> (i32, i32) {
    %c0_i32 = arith.constant 0 : i32
    %c0_i32_0 = arith.constant 0 : i32
    %c0_i32_1 = arith.constant 0 : i32
    return %c0_i32, %c0_i32_0 : i32, i32
  }
  func.func @transform_2(%arg0: i32) -> (i32, i32) {
    %c0_i32 = arith.constant 0 : i32
    %c0_i32_0 = arith.constant 0 : i32
    %c0_i32_1 = arith.constant 0 : i32
    return %c0_i32, %c0_i32_0 : i32, i32
  }
  func.func @transform_3(%arg0: i32) -> (i32, i32) {
    %c0_i32 = arith.constant 0 : i32
    %c0_i32_0 = arith.constant 0 : i32
    return %arg0, %c0_i32 : i32, i32
  }
}

</mosaic_0001>

<llo_original>
// kernel: conv2d_double_block.2
$region0: #{conv2d_double_block.2}
  #allocation0 [shape = 'u32[]', space=smem, size = 0x4, offset = 0x4, fixed_abs, tag = 'smem constant byte address 0x4 - core index']
  #allocation1 [shape = 'u32[144,128]{1,0:T(1,128)}', space=vmem, size = 0x12000, scoped, tag = 'internal scratch']
  #allocation2 [shape = 'bf16[2,18,64]{2,1,0:T(8,128)(2,1)}', space=vmem, size = 0x3000, scoped, tag = 'scratch operand']
  #allocation3 [shape = 'bf16[2,18,128]{2,1,0:T(8,128)(2,1)}', space=vmem, size = 0x3000, scoped, tag = 'scratch operand']
  %s0 = inlined_call_operand.vmem [shape: bf16[2,16,64], index: 0, kind: input, shape index: {}]
  %s1 = inlined_call_operand.vmem [shape: bf16[3,64,128], index: 1, kind: input, shape index: {}]
  %s2 = inlined_call_operand.vmem [shape: bf16[3,128,128], index: 2, kind: input, shape index: {}]
  %s3 = inlined_call_operand.vmem [shape: f32[32,128], index: 3, kind: output, shape index: {0}]
  %s4 = inlined_call_operand.vmem [shape: f32[8,128], index: 4, kind: output, shape index: {1}]
  %s5 = inlined_call_operand.vmem [shape: f32[8,128], index: 5, kind: output, shape index: {2}]
  %6 = xla_tuple %s3, %s4, %s5
  %s7 = sld [smem:[#allocation0]]
  $region38: #{conv2d_double_block.2} parent=0
    _
  %s9 = ssub.s32 1, %s7
  %s10 = scalar_select 0, %s9, %s7
  // Predicated region
  $region2: #{conv2d_double_block.2} parent=0 // pred_check
    _
  $region3: #{conv2d_double_block.2} parent=0 // pred_check_branch
    %12 = sbr.rel (0) target = $region5
  $region4: #{conv2d_double_block.2} parent=0 // pred_region
    _
  $region5: #{conv2d_double_block.2} parent=0 // pred_fallthru
    _
  // Predicated region
  $region6: #{conv2d_double_block.2} parent=0 // pred_check
    _
  $region7: #{conv2d_double_block.2} parent=0 // pred_check_branch
    %14 = sbr.rel (0) target = $region9
  $region8: #{conv2d_double_block.2} parent=0 // pred_region
    _
  $region9: #{conv2d_double_block.2} parent=0 // pred_fallthru
    _
  // Predicated region
  $region10: #{conv2d_double_block.2} parent=0 // pred_check
    _
  $region11: #{conv2d_double_block.2} parent=0 // pred_check_branch
    %16 = sbr.rel (0) target = $region13
  $region12: #{conv2d_double_block.2} parent=0 // pred_region
    _
  $region13: #{conv2d_double_block.2} parent=0 // pred_fallthru
    _
  %vm18 = vcmask 516096
  %vm19 = vsmask.f32 256
  %vm20 = vmand %vm18, %vm19
  %v21 = vld [vmem:[#allocation2] sm:$0x1]
  %v22 = vsel %vm20, 0, %v21
  %23 = vst [vmem:[#allocation2] sm:$0x1] %v22
  %v24 = vld [vmem:[#allocation2 + $0xc] sm:$0x1]
  %v25 = vsel %vm20, 0, %v24
  %26 = vst [vmem:[#allocation2 + $0xc] sm:$0x1] %v25
  %vm27 = vsmask.f32 7938
  %vm28 = vmand %vm18, %vm27
  %v29 = vld [vmem:[#allocation2 + $0x8] sm:$0x1]
  %v30 = vsel %vm28, 0, %v29
  %31 = vst [vmem:[#allocation2 + $0x8] sm:$0x1] %v30
  %v32 = vld [vmem:[#allocation2 + $0x14] sm:$0x1]
  %v33 = vsel %vm28, 0, %v32
  %34 = vst [vmem:[#allocation2 + $0x14] sm:$0x1] %v33
  %vm35 = vcmask 1040384
  %vm36 = vmand %vm35, %vm19
  %v37 = vld [vmem:[#allocation3] sm:$0x1]
  %v38 = vsel %vm36, 0, %v37
  %39 = vst [vmem:[#allocation3] sm:$0x1] %v38
  %v40 = vld [vmem:[#allocation3 + $0xc] sm:$0x1]
  %v41 = vsel %vm36, 0, %v40
  %42 = vst [vmem:[#allocation3 + $0xc] sm:$0x1] %v41
  %vm43 = vmand %vm35, %vm27
  %v44 = vld [vmem:[#allocation3 + $0x8] sm:$0x1]
  %v45 = vsel %vm43, 0, %v44
  %46 = vst [vmem:[#allocation3 + $0x8] sm:$0x1] %v45
  %v47 = vld [vmem:[#allocation3 + $0x14] sm:$0x1]
  %v48 = vsel %vm43, 0, %v47
  %49 = vst [vmem:[#allocation3 + $0x14] sm:$0x1] %v48
  %v50 = vld [vmem:[%s0] sm:$0xf]
  %v51 = vld [vmem:[%s0 + $0x4] sm:$0xf]
  %v52 = vld [vmem:[%s0 + $0x8] sm:$0xf]
  %v53 = vld [vmem:[%s0 + $0xc] sm:$0xf]
  %vm54 = vsmask.f32 4368
  %vm55 = vmor %vm19, %vm54
  %v57 = vshrl.u32 %v50, 16
  %v59 = vrot.slane %v57, 7
  %v60 = vshll.u32 %v50, 16
  %v62 = vor.u32 %v59, %v60
  %v63 = vrot.slane %v59, 4
  %v65 = vshrl.u32 %v51, 16
  %v67 = vrot.slane %v65, 7
  %v68 = vshll.u32 %v51, 16
  %v70 = vor.u32 %v67, %v68
  %v71 = vsel %vm55, %v63, %v70
  %v72 = vrot.slane %v67, 4
  %v74 = vshrl.u32 %v52, 16
  %v76 = vrot.slane %v74, 7
  %v77 = vshll.u32 %v52, 16
  %v79 = vor.u32 %v76, %v77
  %v80 = vrot.slane %v76, 4
  %v82 = vshrl.u32 %v53, 16
  %v84 = vrot.slane %v82, 7
  %v85 = vshll.u32 %v53, 16
  %v87 = vor.u32 %v84, %v85
  %v88 = vsel %vm55, %v80, %v87
  %v89 = vrot.slane %v84, 4
  %vm96 = vcmask 519168
  %vm97 = vmand %vm96, %vm27
  %v98 = vld [vmem:[#allocation2] sm:$0xf]
  %v99 = vsel %vm97, %v62, %v98
  %100 = vst [vmem:[#allocation2] sm:$0xf] %v99
  %vm101 = vcmask 519168
  %102 = vst.msk [vmem:[#allocation2 + $0x4] sm:$0xf] %vm101, %v71
  %v103 = vld [vmem:[#allocation2 + $0x8] sm:$0x1]
  %v104 = vsel %vm20, %v72, %v103
  %105 = vst [vmem:[#allocation2 + $0x8] sm:$0x1] %v104
  %v106 = vld [vmem:[#allocation2 + $0xc] sm:$0xf]
  %v107 = vsel %vm97, %v79, %v106
  %108 = vst [vmem:[#allocation2 + $0xc] sm:$0xf] %v107
  %109 = vst.msk [vmem:[#allocation2 + $0x10] sm:$0xf] %vm101, %v88
  %v110 = vld [vmem:[#allocation2 + $0x14] sm:$0x1]
  %v111 = vsel %vm20, %v89, %v110
  %112 = vst [vmem:[#allocation2 + $0x14] sm:$0x1] %v111
  %v113 = vld [vmem:[#allocation2] sm:$0xf]
  %v114 = vld [vmem:[#allocation2 + $0x4] sm:$0xf]
  %v115 = vld [vmem:[#allocation2 + $0xc] sm:$0xf]
  %v116 = vld [vmem:[#allocation2 + $0x10] sm:$0xf]
  %v117 = vld [vmem:[%s1] sm:$0xf]
  %v118 = vld [vmem:[%s1 + $0x4] sm:$0xf]
  %v119 = vld [vmem:[%s1 + $0x8] sm:$0xf]
  %v120 = vld [vmem:[%s1 + $0xc] sm:$0xf]
  %v121 = vld [vmem:[%s1 + $0x10] sm:$0xf]
  %v122 = vld [vmem:[%s1 + $0x14] sm:$0xf]
  %v123 = vld [vmem:[%s1 + $0x18] sm:$0xf]
  %v124 = vld [vmem:[%s1 + $0x1c] sm:$0xf]
  %v125 = vld [vmem:[#allocation2 + $0x8] sm:$0x1]
  %v126 = vld [vmem:[#allocation2 + $0x14] sm:$0x1]
  %vm127 = vsmask.f32 3328
  %vm128 = vsmask.f32 7440
  %vm129 = vmor %vm127, %vm128
  %v131 = vshrl.u32 %v113, 16
  %v133 = vrot.slane %v131, 4
  %v134 = vshll.u32 %v113, 16
  %v136 = vrot.slane %v134, 5
  %v137 = vor.u32 %v133, %v136
  %v138 = vrot.slane %v137, 4
  %v140 = vshll.u32 %v114, 16
  %v142 = vrot.slane %v140, 5
  %v143 = vsel %vm129, %v138, %v142
  %v144 = vshrl.u32 %v114, 16
  %v146 = vrot.slane %v144, 4
  %v147 = vor.u32 %v146, %v142
  %v148 = vrot.slane %v147, 4
  %v150 = vshll.u32 %v125, 16
  %v152 = vrot.slane %v150, 5
  %v153 = vsel %vm129, %v148, %v152
  %v155 = vshrl.u32 %v115, 16
  %v157 = vrot.slane %v155, 4
  %v158 = vshll.u32 %v115, 16
  %v160 = vrot.slane %v158, 5
  %v161 = vor.u32 %v157, %v160
  %v162 = vrot.slane %v161, 4
  %v164 = vshll.u32 %v116, 16
  %v166 = vrot.slane %v164, 5
  %v167 = vsel %vm129, %v162, %v166
  %v168 = vshrl.u32 %v116, 16
  %v170 = vrot.slane %v168, 4
  %v171 = vor.u32 %v170, %v166
  %v172 = vrot.slane %v171, 4
  %v174 = vshll.u32 %v126, 16
  %v176 = vrot.slane %v174, 5
  %v177 = vsel %vm129, %v172, %v176
  %s178 = scalar_lea.vmem %s1, 32
  %v179 = vld [vmem:[%s178] sm:$0xf]
  %v180 = vld [vmem:[%s178 + $0x4] sm:$0xf]
  %v181 = vld [vmem:[%s178 + $0x8] sm:$0xf]
  %v182 = vld [vmem:[%s178 + $0xc] sm:$0xf]
  %v183 = vld [vmem:[%s178 + $0x10] sm:$0xf]
  %v184 = vld [vmem:[%s178 + $0x14] sm:$0xf]
  %v185 = vld [vmem:[%s178 + $0x18] sm:$0xf]
  %v186 = vld [vmem:[%s178 + $0x1c] sm:$0xf]
  %v187 = vunpack.c.l.b16 %v143
  %v188 = vunpack.c.l.b16 %v153
  %v189 = vunpack.c.l.b16 %v167
  %v190 = vunpack.c.l.b16 %v177
  %v191 = vpack.c.b16 %v188, %v187
  %v192 = vpack.c.b16 %v190, %v189
  %v201 = vunpack.c.l.b16 %v179
  %v202 = vunpack.c.l.b16 %v180
  %v203 = vunpack.c.l.b16 %v181
  %v204 = vunpack.c.l.b16 %v182
  %v205 = vunpack.c.l.b16 %v183
  %v206 = vunpack.c.l.b16 %v184
  %v207 = vunpack.c.l.b16 %v185
  %v208 = vunpack.c.l.b16 %v186
  %v209 = vpack.c.b16 %v202, %v201
  %v210 = vpack.c.b16 %v204, %v203
  %v211 = vpack.c.b16 %v206, %v205
  %v212 = vpack.c.b16 %v208, %v207
  %vm217 = vcmask 523264
  %v219 = vsel %vm217, %v191, 0
  %v222 = vsel %vm217, %v192, 0
  %224 = vmatprep.subr.bf16.mxu0 0
  %225 = vmatpush1.bf16.msra.mxu0 %v209
  %226 = vmatprep.subr.bf16.mxu0 0
  %227 = vmatpush1.bf16.msra.mxu0 %v210
  %228 = vmatprep.subr.bf16.mxu0 0
  %229 = vmatpush1.bf16.msra.mxu0 %v211
  %230 = vmatprep.subr.bf16.mxu0 0
  %231 = vmatpush1.bf16.msra.mxu0 %v212
  %232 = vmatprep.subr.bf16.mxu0 0
  %233 = vmatpush1.bf16.msra.mxu0 0
  %234 = vmatprep.subr.bf16.mxu0 0
  %235 = vmatpush1.bf16.msra.mxu0 0
  %236 = vmatprep.subr.bf16.mxu0 0
  %237 = vmatpush1.bf16.msra.mxu0 0
  %238 = vmatprep.subr.bf16.mxu0 0
  %239 = vmatpush1.bf16.msra.mxu0 0
  %240 = vmatprep.subr.bf16.mxu0 0
  %241 = vmatpush1.bf16.msra.mxu0 0
  %242 = vmatprep.subr.bf16.mxu0 0
  %243 = vmatpush1.bf16.msra.mxu0 0
  %244 = vmatprep.subr.bf16.mxu0 0
  %245 = vmatpush1.bf16.msra.mxu0 0
  %246 = vmatprep.subr.bf16.mxu0 0
  %247 = vmatpush1.bf16.msra.mxu0 0
  %248 = vmatprep.subr.bf16.mxu0 0
  %249 = vmatpush1.bf16.msra.mxu0 0
  %250 = vmatprep.subr.bf16.mxu0 0
  %251 = vmatpush1.bf16.msra.mxu0 0
  %252 = vmatprep.subr.bf16.mxu0 0
  %253 = vmatpush1.bf16.msra.mxu0 0
  %254 = vmatprep.subr.bf16.mxu0 0
  %255 = vmatpush1.bf16.msra.mxu0 0
  %256 = vmatprep.mubr.bf16.mxu0 0
  %257 = vmatmul.mubr.bf16.gmra.mrb[0].mxu0 %v219
  %v258 = vpop.f32.mrb[0].mxu0
  %v259 = vadd.f32 0.0, %v258
  %v260 = vpop.f32.mrb[0].mxu0
  %v261 = vpop.f32.mrb[0].mxu0
  %v262 = vadd.f32 0.0, %v261
  %v263 = vpop.f32.mrb[0].mxu0
  %264 = vmatprep.mubr.bf16.mxu0 0
  %265 = vmatmul.mubr.bf16.gmra.mrb[0].mxu0 %v222
  %v266 = vpop.f32.mrb[0].mxu0
  %v267 = vadd.f32 0.0, %v266
  %v268 = vpop.f32.mrb[0].mxu0
  %v269 = vpop.f32.mrb[0].mxu0
  %v270 = vadd.f32 0.0, %v269
  %v271 = vpop.f32.mrb[0].mxu0
  %272 = vdwg.mxu0
  %v277 = vunpack.c.l.b16 %v113
  %v278 = vunpack.c.l.b16 %v114
  %v279 = vunpack.c.l.b16 %v115
  %v280 = vunpack.c.l.b16 %v116
  %v281 = vpack.c.b16 %v278, %v277
  %v282 = vpack.c.b16 %v280, %v279
  %v291 = vunpack.c.l.b16 %v117
  %v292 = vunpack.c.l.b16 %v118
  %v293 = vunpack.c.l.b16 %v119
  %v294 = vunpack.c.l.b16 %v120
  %v295 = vunpack.c.l.b16 %v121
  %v296 = vunpack.c.l.b16 %v122
  %v297 = vunpack.c.l.b16 %v123
  %v298 = vunpack.c.l.b16 %v124
  %v299 = vpack.c.b16 %v292, %v291
  %v300 = vpack.c.b16 %v294, %v293
  %v301 = vpack.c.b16 %v296, %v295
  %v302 = vpack.c.b16 %v298, %v297
  %v308 = vsel %vm217, %v281, 0
  %v311 = vsel %vm217, %v282, 0
  %313 = vmatprep.subr.bf16.mxu0 0
  %314 = vmatpush1.bf16.msra.mxu0 %v299
  %315 = vmatprep.subr.bf16.mxu0 0
  %316 = vmatpush1.bf16.msra.mxu0 %v300
  %317 = vmatprep.subr.bf16.mxu0 0
  %318 = vmatpush1.bf16.msra.mxu0 %v301
  %319 = vmatprep.subr.bf16.mxu0 0
  %320 = vmatpush1.bf16.msra.mxu0 %v302
  %321 = vmatprep.subr.bf16.mxu0 0
  %322 = vmatpush1.bf16.msra.mxu0 0
  %323 = vmatprep.subr.bf16.mxu0 0
  %324 = vmatpush1.bf16.msra.mxu0 0
  %325 = vmatprep.subr.bf16.mxu0 0
  %326 = vmatpush1.bf16.msra.mxu0 0
  %327 = vmatprep.subr.bf16.mxu0 0
  %328 = vmatpush1.bf16.msra.mxu0 0
  %329 = vmatprep.subr.bf16.mxu0 0
  %330 = vmatpush1.bf16.msra.mxu0 0
  %331 = vmatprep.subr.bf16.mxu0 0
  %332 = vmatpush1.bf16.msra.mxu0 0
  %333 = vmatprep.subr.bf16.mxu0 0
  %334 = vmatpush1.bf16.msra.mxu0 0
  %335 = vmatprep.subr.bf16.mxu0 0
  %336 = vmatpush1.bf16.msra.mxu0 0
  %337 = vmatprep.subr.bf16.mxu0 0
  %338 = vmatpush1.bf16.msra.mxu0 0
  %339 = vmatprep.subr.bf16.mxu0 0
  %340 = vmatpush1.bf16.msra.mxu0 0
  %341 = vmatprep.subr.bf16.mxu0 0
  %342 = vmatpush1.bf16.msra.mxu0 0
  %343 = vmatprep.subr.bf16.mxu0 0
  %344 = vmatpush1.bf16.msra.mxu0 0
  %345 = vmatprep.mubr.bf16.mxu0 0
  %346 = vmatmul.mubr.bf16.gmra.mrb[0].mxu0 %v308
  %v347 = vpop.f32.mrb[0].mxu0
  %v348 = vadd.f32 %v259, %v347
  %v349 = vpop.f32.mrb[0].mxu0
  %v350 = vpop.f32.mrb[0].mxu0
  %v351 = vadd.f32 %v262, %v350
  %v352 = vpop.f32.mrb[0].mxu0
  %353 = vmatprep.mubr.bf16.mxu0 0
  %354 = vmatmul.mubr.bf16.gmra.mrb[0].mxu0 %v311
  %v355 = vpop.f32.mrb[0].mxu0
  %v356 = vadd.f32 %v267, %v355
  %v357 = vpop.f32.mrb[0].mxu0
  %v358 = vpop.f32.mrb[0].mxu0
  %v359 = vadd.f32 %v270, %v358
  %v360 = vpop.f32.mrb[0].mxu0
  %361 = vdwg.mxu0
  %v362 = vld [vmem:[#allocation2] sm:$0xe]
  %v363 = vld [vmem:[#allocation2 + $0xc] sm:$0xe]
  %vm368 = vcmask 1042432
  %vm369 = vcmask 1046532
  %vm370 = vmor %vm368, %vm369
  %v371 = vrot.slane %v362, 5
  %v372 = vrot.slane %v371, 4
  %v373 = vrot.slane %v114, 5
  %v374 = vsel %vm370, %v372, %v373
  %v375 = vrot.slane %v373, 4
  %v376 = vrot.slane %v125, 5
  %v377 = vsel %vm370, %v375, %v376
  %v378 = vrot.slane %v363, 5
  %v379 = vrot.slane %v378, 4
  %v380 = vrot.slane %v116, 5
  %v381 = vsel %vm370, %v379, %v380
  %v382 = vrot.slane %v380, 4
  %v383 = vrot.slane %v126, 5
  %v384 = vsel %vm370, %v382, %v383
  %s385 = scalar_lea.vmem %s1, 64
  %v386 = vld [vmem:[%s385] sm:$0xf]
  %v387 = vld [vmem:[%s385 + $0x4] sm:$0xf]
  %v388 = vld [vmem:[%s385 + $0x8] sm:$0xf]
  %v389 = vld [vmem:[%s385 + $0xc] sm:$0xf]
  %v390 = vld [vmem:[%s385 + $0x10] sm:$0xf]
  %v391 = vld [vmem:[%s385 + $0x14] sm:$0xf]
  %v392 = vld [vmem:[%s385 + $0x18] sm:$0xf]
  %v393 = vld [vmem:[%s385 + $0x1c] sm:$0xf]
  %v394 = vunpack.c.l.b16 %v374
  %v395 = vunpack.c.l.b16 %v377
  %v396 = vunpack.c.l.b16 %v381
  %v397 = vunpack.c.l.b16 %v384
  %v398 = vpack.c.b16 %v395, %v394
  %v399 = vpack.c.b16 %v397, %v396
  %v408 = vunpack.c.l.b16 %v386
  %v409 = vunpack.c.l.b16 %v387
  %v410 = vunpack.c.l.b16 %v388
  %v411 = vunpack.c.l.b16 %v389
  %v412 = vunpack.c.l.b16 %v390
  %v413 = vunpack.c.l.b16 %v391
  %v414 = vunpack.c.l.b16 %v392
  %v415 = vunpack.c.l.b16 %v393
  %v416 = vpack.c.b16 %v409, %v408
  %v417 = vpack.c.b16 %v411, %v410
  %v418 = vpack.c.b16 %v413, %v412
  %v419 = vpack.c.b16 %v415, %v414
  %v425 = vsel %vm217, %v398, 0
  %v428 = vsel %vm217, %v399, 0
  %430 = vmatprep.subr.bf16.mxu0 0
  %431 = vmatpush1.bf16.msra.mxu0 %v416
  %432 = vmatprep.subr.bf16.mxu0 0
  %433 = vmatpush1.bf16.msra.mxu0 %v417
  %434 = vmatprep.subr.bf16.mxu0 0
  %435 = vmatpush1.bf16.msra.mxu0 %v418
  %436 = vmatprep.subr.bf16.mxu0 0
  %437 = vmatpush1.bf16.msra.mxu0 %v419
  %438 = vmatprep.subr.bf16.mxu0 0
  %439 = vmatpush1.bf16.msra.mxu0 0
  %440 = vmatprep.subr.bf16.mxu0 0
  %441 = vmatpush1.bf16.msra.mxu0 0
  %442 = vmatprep.subr.bf16.mxu0 0
  %443 = vmatpush1.bf16.msra.mxu0 0
  %444 = vmatprep.subr.bf16.mxu0 0
  %445 = vmatpush1.bf16.msra.mxu0 0
  %446 = vmatprep.subr.bf16.mxu0 0
  %447 = vmatpush1.bf16.msra.mxu0 0
  %448 = vmatprep.subr.bf16.mxu0 0
  %449 = vmatpush1.bf16.msra.mxu0 0
  %450 = vmatprep.subr.bf16.mxu0 0
  %451 = vmatpush1.bf16.msra.mxu0 0
  %452 = vmatprep.subr.bf16.mxu0 0
  %453 = vmatpush1.bf16.msra.mxu0 0
  %454 = vmatprep.subr.bf16.mxu0 0
  %455 = vmatpush1.bf16.msra.mxu0 0
  %456 = vmatprep.subr.bf16.mxu0 0
  %457 = vmatpush1.bf16.msra.mxu0 0
  %458 = vmatprep.subr.bf16.mxu0 0
  %459 = vmatpush1.bf16.msra.mxu0 0
  %460 = vmatprep.subr.bf16.mxu0 0
  %461 = vmatpush1.bf16.msra.mxu0 0
  %462 = vmatprep.mubr.bf16.mxu0 0
  %463 = vmatmul.mubr.bf16.gmra.mrb[0].mxu0 %v425
  %v464 = vpop.f32.mrb[0].mxu0
  %v465 = vadd.f32 0.0, %v464
  %v466 = vpop.f32.mrb[0].mxu0
  %v467 = vpop.f32.mrb[0].mxu0
  %v468 = vadd.f32 0.0, %v467
  %v469 = vpop.f32.mrb[0].mxu0
  %470 = vmatprep.mubr.bf16.mxu0 0
  %471 = vmatmul.mubr.bf16.gmra.mrb[0].mxu0 %v428
  %v472 = vpop.f32.mrb[0].mxu0
  %v473 = vadd.f32 0.0, %v472
  %v474 = vpop.f32.mrb[0].mxu0
  %v475 = vpop.f32.mrb[0].mxu0
  %v476 = vadd.f32 0.0, %v475
  %v477 = vpop.f32.mrb[0].mxu0
  %478 = vdwg.mxu0
  %v479 = vadd.f32 %v348, %v465
  %v480 = vadd.f32 %v351, %v468
  %v481 = vadd.f32 %v356, %v473
  %v482 = vadd.f32 %v359, %v476
  %vm483 = vcmp.ge.f32.partialorder %v479, 0.0
  %vm484 = vcmp.ge.f32.partialorder %v480, 0.0
  %vm485 = vcmp.ge.f32.partialorder %v481, 0.0
  %vm486 = vcmp.ge.f32.partialorder %v482, 0.0
  %v487 = vmul.f32 %v479, 0.01
  %v488 = vmul.f32 %v480, 0.01
  %v489 = vmul.f32 %v481, 0.01
  %v490 = vmul.f32 %v482, 0.01
  %v491 = vsel %vm483, %v479, %v487
  %v492 = vsel %vm484, %v480, %v488
  %v493 = vsel %vm485, %v481, %v489
  %v494 = vsel %vm486, %v482, %v490
  %v495 = vpack.c.bf16 %v492, %v491
  %v496 = vpack.c.bf16 %v494, %v493
  %v499 = vunpack.c.l.b16 %v495
  %v500 = vunpack.c.h.b16 %v495
  %v501 = vunpack.c.l.b16 %v496
  %v502 = vunpack.c.h.b16 %v496
  %v503 = vpack.c.b16 %v499, %v499
  %v504 = vpack.c.b16 %v500, %v500
  %v505 = vpack.c.b16 %v501, %v501
  %v506 = vpack.c.b16 %v502, %v502
  %v508 = vshrl.u32 %v503, 16
  %v510 = vrot.slane %v508, 7
  %v511 = vshll.u32 %v503, 16
  %v513 = vor.u32 %v510, %v511
  %v514 = vrot.slane %v510, 4
  %v516 = vshrl.u32 %v504, 16
  %v518 = vrot.slane %v516, 7
  %v519 = vshll.u32 %v504, 16
  %v521 = vor.u32 %v518, %v519
  %v522 = vsel %vm55, %v514, %v521
  %v523 = vrot.slane %v518, 4
  %v525 = vshrl.u32 %v505, 16
  %v527 = vrot.slane %v525, 7
  %v528 = vshll.u32 %v505, 16
  %v530 = vor.u32 %v527, %v528
  %v531 = vrot.slane %v527, 4
  %v533 = vshrl.u32 %v506, 16
  %v535 = vrot.slane %v533, 7
  %v536 = vshll.u32 %v506, 16
  %v538 = vor.u32 %v535, %v536
  %v539 = vsel %vm55, %v531, %v538
  %v540 = vrot.slane %v535, 4
  %vm547 = vcmask 1043456
  %vm548 = vmand %vm547, %vm27
  %v549 = vld [vmem:[#allocation3] sm:$0xf]
  %v550 = vsel %vm548, %v513, %v549
  %551 = vst [vmem:[#allocation3] sm:$0xf] %v550
  %552 = vst [vmem:[#allocation3 + $0x4] sm:$0xf] %v522
  %v553 = vld [vmem:[#allocation3 + $0x8] sm:$0x1]
  %v554 = vsel %vm36, %v523, %v553
  %555 = vst [vmem:[#allocation3 + $0x8] sm:$0x1] %v554
  %v556 = vld [vmem:[#allocation3 + $0xc] sm:$0xf]
  %v557 = vsel %vm548, %v530, %v556
  %558 = vst [vmem:[#allocation3 + $0xc] sm:$0xf] %v557
  %559 = vst [vmem:[#allocation3 + $0x10] sm:$0xf] %v539
  %v560 = vld [vmem:[#allocation3 + $0x14] sm:$0x1]
  %v561 = vsel %vm36, %v540, %v560
  %562 = vst [vmem:[#allocation3 + $0x14] sm:$0x1] %v561
  %v563 = vld [vmem:[#allocation3] sm:$0xf]
  %v564 = vld [vmem:[#allocation3 + $0x4] sm:$0xf]
  %v565 = vld [vmem:[#allocation3 + $0xc] sm:$0xf]
  %v566 = vld [vmem:[#allocation3 + $0x10] sm:$0xf]
  %v567 = vld [vmem:[%s2] sm:$0xf]
  %v568 = vld [vmem:[%s2 + $0x4] sm:$0xf]
  %v569 = vld [vmem:[%s2 + $0x8] sm:$0xf]
  %v570 = vld [vmem:[%s2 + $0xc] sm:$0xf]
  %v571 = vld [vmem:[%s2 + $0x10] sm:$0xf]
  %v572 = vld [vmem:[%s2 + $0x14] sm:$0xf]
  %v573 = vld [vmem:[%s2 + $0x18] sm:$0xf]
  %v574 = vld [vmem:[%s2 + $0x1c] sm:$0xf]
  %v575 = vld [vmem:[%s2 + $0x20] sm:$0xf]
  %v576 = vld [vmem:[%s2 + $0x24] sm:$0xf]
  %v577 = vld [vmem:[%s2 + $0x28] sm:$0xf]
  %v578 = vld [vmem:[%s2 + $0x2c] sm:$0xf]
  %v579 = vld [vmem:[%s2 + $0x30] sm:$0xf]
  %v580 = vld [vmem:[%s2 + $0x34] sm:$0xf]
  %v581 = vld [vmem:[%s2 + $0x38] sm:$0xf]
  %v582 = vld [vmem:[%s2 + $0x3c] sm:$0xf]
  %v583 = vld [vmem:[#allocation3 + $0x8] sm:$0x1]
  %v584 = vld [vmem:[#allocation3 + $0x14] sm:$0x1]
  %v586 = vshrl.u32 %v563, 16
  %v588 = vrot.slane %v586, 4
  %v589 = vshll.u32 %v563, 16
  %v591 = vrot.slane %v589, 5
  %v592 = vor.u32 %v588, %v591
  %v593 = vrot.slane %v592, 4
  %v595 = vshll.u32 %v564, 16
  %v597 = vrot.slane %v595, 5
  %v598 = vsel %vm129, %v593, %v597
  %v599 = vshrl.u32 %v564, 16
  %v601 = vrot.slane %v599, 4
  %v602 = vor.u32 %v601, %v597
  %v603 = vrot.slane %v602, 4
  %v605 = vshll.u32 %v583, 16
  %v607 = vrot.slane %v605, 5
  %v608 = vsel %vm129, %v603, %v607
  %v610 = vshrl.u32 %v565, 16
  %v612 = vrot.slane %v610, 4
  %v613 = vshll.u32 %v565, 16
  %v615 = vrot.slane %v613, 5
  %v616 = vor.u32 %v612, %v615
  %v617 = vrot.slane %v616, 4
  %v619 = vshll.u32 %v566, 16
  %v621 = vrot.slane %v619, 5
  %v622 = vsel %vm129, %v617, %v621
  %v623 = vshrl.u32 %v566, 16
  %v625 = vrot.slane %v623, 4
  %v626 = vor.u32 %v625, %v621
  %v627 = vrot.slane %v626, 4
  %v629 = vshll.u32 %v584, 16
  %v631 = vrot.slane %v629, 5
  %v632 = vsel %vm129, %v627, %v631
  %s633 = scalar_lea.vmem %s2, 64
  %v634 = vld [vmem:[%s633] sm:$0xf]
  %v635 = vld [vmem:[%s633 + $0x4] sm:$0xf]
  %v636 = vld [vmem:[%s633 + $0x8] sm:$0xf]
  %v637 = vld [vmem:[%s633 + $0xc] sm:$0xf]
  %v638 = vld [vmem:[%s633 + $0x10] sm:$0xf]
  %v639 = vld [vmem:[%s633 + $0x14] sm:$0xf]
  %v640 = vld [vmem:[%s633 + $0x18] sm:$0xf]
  %v641 = vld [vmem:[%s633 + $0x1c] sm:$0xf]
  %v642 = vld [vmem:[%s633 + $0x20] sm:$0xf]
  %v643 = vld [vmem:[%s633 + $0x24] sm:$0xf]
  %v644 = vld [vmem:[%s633 + $0x28] sm:$0xf]
  %v645 = vld [vmem:[%s633 + $0x2c] sm:$0xf]
  %v646 = vld [vmem:[%s633 + $0x30] sm:$0xf]
  %v647 = vld [vmem:[%s633 + $0x34] sm:$0xf]
  %v648 = vld [vmem:[%s633 + $0x38] sm:$0xf]
  %v649 = vld [vmem:[%s633 + $0x3c] sm:$0xf]
  %v650 = vunpack.c.l.b16 %v598
  %v651 = vunpack.c.l.b16 %v608
  %v652 = vunpack.c.l.b16 %v622
  %v653 = vunpack.c.l.b16 %v632
  %v654 = vpack.c.b16 %v651, %v650
  %v655 = vpack.c.b16 %v653, %v652
  %v674 = vunpack.c.l.b16 %v634
  %v675 = vunpack.c.l.b16 %v635
  %v676 = vunpack.c.l.b16 %v636
  %v677 = vunpack.c.l.b16 %v637
  %v678 = vunpack.c.l.b16 %v638
  %v679 = vunpack.c.l.b16 %v639
  %v680 = vunpack.c.l.b16 %v640
  %v681 = vunpack.c.l.b16 %v641
  %v682 = vunpack.c.l.b16 %v642
  %v683 = vunpack.c.l.b16 %v643
  %v684 = vunpack.c.l.b16 %v644
  %v685 = vunpack.c.l.b16 %v645
  %v686 = vunpack.c.l.b16 %v646
  %v687 = vunpack.c.l.b16 %v647
  %v688 = vunpack.c.l.b16 %v648
  %v689 = vunpack.c.l.b16 %v649
  %v690 = vpack.c.b16 %v675, %v674
  %v691 = vpack.c.b16 %v677, %v676
  %v692 = vpack.c.b16 %v679, %v678
  %v693 = vpack.c.b16 %v681, %v680
  %v694 = vpack.c.b16 %v683, %v682
  %v695 = vpack.c.b16 %v685, %v684
  %v696 = vpack.c.b16 %v687, %v686
  %v697 = vpack.c.b16 %v689, %v688
  %706 = vmatprep.subr.bf16.mxu0 0
  %707 = vmatpush1.bf16.msra.mxu0 %v690
  %708 = vmatprep.subr.bf16.mxu0 0
  %709 = vmatpush1.bf16.msra.mxu0 %v691
  %710 = vmatprep.subr.bf16.mxu0 0
  %711 = vmatpush1.bf16.msra.mxu0 %v692
  %712 = vmatprep.subr.bf16.mxu0 0
  %713 = vmatpush1.bf16.msra.mxu0 %v693
  %714 = vmatprep.subr.bf16.mxu0 0
  %715 = vmatpush1.bf16.msra.mxu0 %v694
  %716 = vmatprep.subr.bf16.mxu0 0
  %717 = vmatpush1.bf16.msra.mxu0 %v695
  %718 = vmatprep.subr.bf16.mxu0 0
  %719 = vmatpush1.bf16.msra.mxu0 %v696
  %720 = vmatprep.subr.bf16.mxu0 0
  %721 = vmatpush1.bf16.msra.mxu0 %v697
  %722 = vmatprep.subr.bf16.mxu0 0
  %723 = vmatpush1.bf16.msra.mxu0 0
  %724 = vmatprep.subr.bf16.mxu0 0
  %725 = vmatpush1.bf16.msra.mxu0 0
  %726 = vmatprep.subr.bf16.mxu0 0
  %727 = vmatpush1.bf16.msra.mxu0 0
  %728 = vmatprep.subr.bf16.mxu0 0
  %729 = vmatpush1.bf16.msra.mxu0 0
  %730 = vmatprep.subr.bf16.mxu0 0
  %731 = vmatpush1.bf16.msra.mxu0 0
  %732 = vmatprep.subr.bf16.mxu0 0
  %733 = vmatpush1.bf16.msra.mxu0 0
  %734 = vmatprep.subr.bf16.mxu0 0
  %735 = vmatpush1.bf16.msra.mxu0 0
  %736 = vmatprep.subr.bf16.mxu0 0
  %737 = vmatpush1.bf16.msra.mxu0 0
  %738 = vmatprep.mubr.bf16.mxu0 0
  %739 = vmatmul.mubr.bf16.gmra.mrb[0].mxu0 %v654
  %v740 = vpop.f32.mrb[0].mxu0
  %v741 = vadd.f32 0.0, %v740
  %v742 = vpop.f32.mrb[0].mxu0
  %v743 = vpop.f32.mrb[0].mxu0
  %v744 = vadd.f32 0.0, %v743
  %v745 = vpop.f32.mrb[0].mxu0
  %746 = vmatprep.mubr.bf16.mxu0 0
  %747 = vmatmul.mubr.bf16.gmra.mrb[0].mxu0 %v655
  %v748 = vpop.f32.mrb[0].mxu0
  %v749 = vadd.f32 0.0, %v748
  %v750 = vpop.f32.mrb[0].mxu0
  %v751 = vpop.f32.mrb[0].mxu0
  %v752 = vadd.f32 0.0, %v751
  %v753 = vpop.f32.mrb[0].mxu0
  %754 = vdwg.mxu0
  %v759 = vunpack.c.l.b16 %v563
  %v760 = vunpack.c.l.b16 %v564
  %v761 = vunpack.c.l.b16 %v565
  %v762 = vunpack.c.l.b16 %v566
  %v763 = vpack.c.b16 %v760, %v759
  %v764 = vpack.c.b16 %v762, %v761
  %v783 = vunpack.c.l.b16 %v567
  %v784 = vunpack.c.l.b16 %v568
  %v785 = vunpack.c.l.b16 %v569
  %v786 = vunpack.c.l.b16 %v570
  %v787 = vunpack.c.l.b16 %v571
  %v788 = vunpack.c.l.b16 %v572
  %v789 = vunpack.c.l.b16 %v573
  %v790 = vunpack.c.l.b16 %v574
  %v791 = vunpack.c.l.b16 %v575
  %v792 = vunpack.c.l.b16 %v576
  %v793 = vunpack.c.l.b16 %v577
  %v794 = vunpack.c.l.b16 %v578
  %v795 = vunpack.c.l.b16 %v579
  %v796 = vunpack.c.l.b16 %v580
  %v797 = vunpack.c.l.b16 %v581
  %v798 = vunpack.c.l.b16 %v582
  %v799 = vpack.c.b16 %v784, %v783
  %v800 = vpack.c.b16 %v786, %v785
  %v801 = vpack.c.b16 %v788, %v787
  %v802 = vpack.c.b16 %v790, %v789
  %v803 = vpack.c.b16 %v792, %v791
  %v804 = vpack.c.b16 %v794, %v793
  %v805 = vpack.c.b16 %v796, %v795
  %v806 = vpack.c.b16 %v798, %v797
  %815 = vmatprep.subr.bf16.mxu0 0
  %816 = vmatpush1.bf16.msra.mxu0 %v799
  %817 = vmatprep.subr.bf16.mxu0 0
  %818 = vmatpush1.bf16.msra.mxu0 %v800
  %819 = vmatprep.subr.bf16.mxu0 0
  %820 = vmatpush1.bf16.msra.mxu0 %v801
  %821 = vmatprep.subr.bf16.mxu0 0
  %822 = vmatpush1.bf16.msra.mxu0 %v802
  %823 = vmatprep.subr.bf16.mxu0 0
  %824 = vmatpush1.bf16.msra.mxu0 %v803
  %825 = vmatprep.subr.bf16.mxu0 0
  %826 = vmatpush1.bf16.msra.mxu0 %v804
  %827 = vmatprep.subr.bf16.mxu0 0
  %828 = vmatpush1.bf16.msra.mxu0 %v805
  %829 = vmatprep.subr.bf16.mxu0 0
  %830 = vmatpush1.bf16.msra.mxu0 %v806
  %831 = vmatprep.subr.bf16.mxu0 0
  %832 = vmatpush1.bf16.msra.mxu0 0
  %833 = vmatprep.subr.bf16.mxu0 0
  %834 = vmatpush1.bf16.msra.mxu0 0
  %835 = vmatprep.subr.bf16.mxu0 0
  %836 = vmatpush1.bf16.msra.mxu0 0
  %837 = vmatprep.subr.bf16.mxu0 0
  %838 = vmatpush1.bf16.msra.mxu0 0
  %839 = vmatprep.subr.bf16.mxu0 0
  %840 = vmatpush1.bf16.msra.mxu0 0
  %841 = vmatprep.subr.bf16.mxu0 0
  %842 = vmatpush1.bf16.msra.mxu0 0
  %843 = vmatprep.subr.bf16.mxu0 0
  %844 = vmatpush1.bf16.msra.mxu0 0
  %845 = vmatprep.subr.bf16.mxu0 0
  %846 = vmatpush1.bf16.msra.mxu0 0
  %847 = vmatprep.mubr.bf16.mxu0 0
  %848 = vmatmul.mubr.bf16.gmra.mrb[0].mxu0 %v763
  %v849 = vpop.f32.mrb[0].mxu0
  %v850 = vadd.f32 %v741, %v849
  %v851 = vpop.f32.mrb[0].mxu0
  %v852 = vpop.f32.mrb[0].mxu0
  %v853 = vadd.f32 %v744, %v852
  %v854 = vpop.f32.mrb[0].mxu0
  %855 = vmatprep.mubr.bf16.mxu0 0
  %856 = vmatmul.mubr.bf16.gmra.mrb[0].mxu0 %v764
  %v857 = vpop.f32.mrb[0].mxu0
  %v858 = vadd.f32 %v749, %v857
  %v859 = vpop.f32.mrb[0].mxu0
  %v860 = vpop.f32.mrb[0].mxu0
  %v861 = vadd.f32 %v752, %v860
  %v862 = vpop.f32.mrb[0].mxu0
  %863 = vdwg.mxu0
  %v864 = vld [vmem:[#allocation3] sm:$0xe]
  %v865 = vld [vmem:[#allocation3 + $0xc] sm:$0xe]
  %v870 = vrot.slane %v864, 5
  %v871 = vrot.slane %v870, 4
  %v872 = vrot.slane %v564, 5
  %v873 = vsel %vm370, %v871, %v872
  %v874 = vrot.slane %v872, 4
  %v875 = vrot.slane %v583, 5
  %v876 = vsel %vm370, %v874, %v875
  %v877 = vrot.slane %v865, 5
  %v878 = vrot.slane %v877, 4
  %v879 = vrot.slane %v566, 5
  %v880 = vsel %vm370, %v878, %v879
  %v881 = vrot.slane %v879, 4
  %v882 = vrot.slane %v584, 5
  %v883 = vsel %vm370, %v881, %v882
  %s884 = scalar_lea.vmem %s2, 128
  %v885 = vld [vmem:[%s884] sm:$0xf]
  %v886 = vld [vmem:[%s884 + $0x4] sm:$0xf]
  %v887 = vld [vmem:[%s884 + $0x8] sm:$0xf]
  %v888 = vld [vmem:[%s884 + $0xc] sm:$0xf]
  %v889 = vld [vmem:[%s884 + $0x10] sm:$0xf]
  %v890 = vld [vmem:[%s884 + $0x14] sm:$0xf]
  %v891 = vld [vmem:[%s884 + $0x18] sm:$0xf]
  %v892 = vld [vmem:[%s884 + $0x1c] sm:$0xf]
  %v893 = vld [vmem:[%s884 + $0x20] sm:$0xf]
  %v894 = vld [vmem:[%s884 + $0x24] sm:$0xf]
  %v895 = vld [vmem:[%s884 + $0x28] sm:$0xf]
  %v896 = vld [vmem:[%s884 + $0x2c] sm:$0xf]
  %v897 = vld [vmem:[%s884 + $0x30] sm:$0xf]
  %v898 = vld [vmem:[%s884 + $0x34] sm:$0xf]
  %v899 = vld [vmem:[%s884 + $0x38] sm:$0xf]
  %v900 = vld [vmem:[%s884 + $0x3c] sm:$0xf]
  %v901 = vunpack.c.l.b16 %v873
  %v902 = vunpack.c.l.b16 %v876
  %v903 = vunpack.c.l.b16 %v880
  %v904 = vunpack.c.l.b16 %v883
  %v905 = vpack.c.b16 %v902, %v901
  %v906 = vpack.c.b16 %v904, %v903
  %v925 = vunpack.c.l.b16 %v885
  %v926 = vunpack.c.l.b16 %v886
  %v927 = vunpack.c.l.b16 %v887
  %v928 = vunpack.c.l.b16 %v888
  %v929 = vunpack.c.l.b16 %v889
  %v930 = vunpack.c.l.b16 %v890
  %v931 = vunpack.c.l.b16 %v891
  %v932 = vunpack.c.l.b16 %v892
  %v933 = vunpack.c.l.b16 %v893
  %v934 = vunpack.c.l.b16 %v894
  %v935 = vunpack.c.l.b16 %v895
  %v936 = vunpack.c.l.b16 %v896
  %v937 = vunpack.c.l.b16 %v897
  %v938 = vunpack.c.l.b16 %v898
  %v939 = vunpack.c.l.b16 %v899
  %v940 = vunpack.c.l.b16 %v900
  %v941 = vpack.c.b16 %v926, %v925
  %v942 = vpack.c.b16 %v928, %v927
  %v943 = vpack.c.b16 %v930, %v929
  %v944 = vpack.c.b16 %v932, %v931
  %v945 = vpack.c.b16 %v934, %v933
  %v946 = vpack.c.b16 %v936, %v935
  %v947 = vpack.c.b16 %v938, %v937
  %v948 = vpack.c.b16 %v940, %v939
  %957 = vmatprep.subr.bf16.mxu0 0
  %958 = vmatpush1.bf16.msra.mxu0 %v941
  %959 = vmatprep.subr.bf16.mxu0 0
  %960 = vmatpush1.bf16.msra.mxu0 %v942
  %961 = vmatprep.subr.bf16.mxu0 0
  %962 = vmatpush1.bf16.msra.mxu0 %v943
  %963 = vmatprep.subr.bf16.mxu0 0
  %964 = vmatpush1.bf16.msra.mxu0 %v944
  %965 = vmatprep.subr.bf16.mxu0 0
  %966 = vmatpush1.bf16.msra.mxu0 %v945
  %967 = vmatprep.subr.bf16.mxu0 0
  %968 = vmatpush1.bf16.msra.mxu0 %v946
  %969 = vmatprep.subr.bf16.mxu0 0
  %970 = vmatpush1.bf16.msra.mxu0 %v947
  %971 = vmatprep.subr.bf16.mxu0 0
  %972 = vmatpush1.bf16.msra.mxu0 %v948
  %973 = vmatprep.subr.bf16.mxu0 0
  %974 = vmatpush1.bf16.msra.mxu0 0
  %975 = vmatprep.subr.bf16.mxu0 0
  %976 = vmatpush1.bf16.msra.mxu0 0
  %977 = vmatprep.subr.bf16.mxu0 0
  %978 = vmatpush1.bf16.msra.mxu0 0
  %979 = vmatprep.subr.bf16.mxu0 0
  %980 = vmatpush1.bf16.msra.mxu0 0
  %981 = vmatprep.subr.bf16.mxu0 0
  %982 = vmatpush1.bf16.msra.mxu0 0
  %983 = vmatprep.subr.bf16.mxu0 0
  %984 = vmatpush1.bf16.msra.mxu0 0
  %985 = vmatprep.subr.bf16.mxu0 0
  %986 = vmatpush1.bf16.msra.mxu0 0
  %987 = vmatprep.subr.bf16.mxu0 0
  %988 = vmatpush1.bf16.msra.mxu0 0
  %989 = vmatprep.mubr.bf16.mxu0 0
  %990 = vmatmul.mubr.bf16.gmra.mrb[0].mxu0 %v905
  %v991 = vpop.f32.mrb[0].mxu0
  %v992 = vadd.f32 0.0, %v991
  %v993 = vpop.f32.mrb[0].mxu0
  %v994 = vpop.f32.mrb[0].mxu0
  %v995 = vadd.f32 0.0, %v994
  %v996 = vpop.f32.mrb[0].mxu0
  %997 = vmatprep.mubr.bf16.mxu0 0
  %998 = vmatmul.mubr.bf16.gmra.mrb[0].mxu0 %v906
  %v999 = vpop.f32.mrb[0].mxu0
  %v1000 = vadd.f32 0.0, %v999
  %v1001 = vpop.f32.mrb[0].mxu0
  %v1002 = vpop.f32.mrb[0].mxu0
  %v1003 = vadd.f32 0.0, %v1002
  %v1004 = vpop.f32.mrb[0].mxu0
  %1005 = vdwg.mxu0
  %v1006 = vadd.f32 %v850, %v992
  %v1007 = vadd.f32 %v853, %v995
  %v1008 = vadd.f32 %v858, %v1000
  %v1009 = vadd.f32 %v861, %v1003
  %1010 = vst [vmem:[%s3] sm:$0xff] %v1006
  %1011 = vst [vmem:[%s3 + $0x8] sm:$0xff] %v1007
  %1012 = vst [vmem:[%s3 + $0x10] sm:$0xff] %v1008
  %1013 = vst [vmem:[%s3 + $0x18] sm:$0xff] %v1009
  %v1014 = vadd.f32 %v1006, %v1007
  %v1015 = vadd.f32 %v1014, %v1008
  %v1016 = vadd.f32 %v1015, %v1009
  %v1017 = vrot.slane %v1016, 4
  %v1018 = vadd.f32 %v1016, %v1017
  %v1019 = vrot.slane %v1018, 2
  %v1020 = vadd.f32 %v1018, %v1019
  %v1021 = vrot.slane %v1020, 1
  %v1022 = vadd.f32 %v1020, %v1021
  %v1023 = vmul.f32 %v1006, %v1006
  %v1024 = vmul.f32 %v1007, %v1007
  %v1025 = vmul.f32 %v1008, %v1008
  %v1026 = vmul.f32 %v1009, %v1009
  %v1027 = vadd.f32 %v1023, %v1024
  %v1028 = vadd.f32 %v1027, %v1025
  %v1029 = vadd.f32 %v1028, %v1026
  %v1030 = vrot.slane %v1029, 4
  %v1031 = vadd.f32 %v1029, %v1030
  %v1032 = vrot.slane %v1031, 2
  %v1033 = vadd.f32 %v1031, %v1032
  %v1034 = vrot.slane %v1033, 1
  %v1035 = vadd.f32 %v1033, %v1034
  %1036 = vst [vmem:[%s4] sm:$0xff] %v1022
  %1037 = vst [vmem:[%s5] sm:$0xff] %v1035
  // Predicated region
  $region14: #{conv2d_double_block.2} parent=0 // pred_check
    _
  $region15: #{conv2d_double_block.2} parent=0 // pred_check_branch
    %1039 = sbr.rel (0) target = $region17
  $region16: #{conv2d_double_block.2} parent=0 // pred_region
    _
  $region17: #{conv2d_double_block.2} parent=0 // pred_fallthru
    _
  // Predicated region
  $region18: #{conv2d_double_block.2} parent=0 // pred_check
    _
  $region19: #{conv2d_double_block.2} parent=0 // pred_check_branch
    %1041 = sbr.rel (0) target = $region21
  $region20: #{conv2d_double_block.2} parent=0 // pred_region
    _
  $region21: #{conv2d_double_block.2} parent=0 // pred_fallthru
    _
  // Predicated region
  $region22: #{conv2d_double_block.2} parent=0 // pred_check
    _
  $region23: #{conv2d_double_block.2} parent=0 // pred_check_branch
    %1043 = sbr.rel (0) target = $region25
  $region24: #{conv2d_double_block.2} parent=0 // pred_region
    _
  $region25: #{conv2d_double_block.2} parent=0 // pred_fallthru
    _
  // Predicated region
  $region26: #{conv2d_double_block.2} parent=0 // pred_check
    _
  $region27: #{conv2d_double_block.2} parent=0 // pred_check_branch
    %1045 = sbr.rel (0) target = $region29
  $region28: #{conv2d_double_block.2} parent=0 // pred_region
    _
  $region29: #{conv2d_double_block.2} parent=0 // pred_fallthru
    _
  // Predicated region
  $region30: #{conv2d_double_block.2} parent=0 // pred_check
    _
  $region31: #{conv2d_double_block.2} parent=0 // pred_check_branch
    %1047 = sbr.rel (0) target = $region33
  $region32: #{conv2d_double_block.2} parent=0 // pred_region
    _
  $region33: #{conv2d_double_block.2} parent=0 // pred_fallthru
    _
  // Predicated region
  $region34: #{conv2d_double_block.2} parent=0 // pred_check
    _
  $region35: #{conv2d_double_block.2} parent=0 // pred_check_branch
    %1049 = sbr.rel (0) target = $region37
  $region36: #{conv2d_double_block.2} parent=0 // pred_region
    _
  $region37: #{conv2d_double_block.2} parent=0 // pred_fallthru
    _

// kernel: tile.13
$region0: #{tile.13}
  #allocation0 [shape = 's32[1]{0}', space=sflag, size = 0x4, scoped, tag = 'scoped memory for tile.13']
  %s0 = inlined_call_operand.vmem [shape: f32[8], index: 0, kind: input, shape index: {}]
  %s1 = inlined_call_operand.vmem [shape: f32[16,8], index: 1, kind: output, shape index: {}]
  // Predicated region
  $region2: #{tile.13} parent=0 // pred_check
    _
  $region3: #{tile.13} parent=0 // pred_check_branch
    %3 = sbr.rel (0) target = $region5
  $region4: #{tile.13} parent=0 // pred_region
    _
  $region5: #{tile.13} parent=0 // pred_fallthru
    _
  %v4 = vld [vmem:[%s0] ss:$0 sm:$0xff]
  %5 = vst [vmem:[%s1] sm:$0xff] %v4
  %s6 = scalar_lea.vmem %s1, 8
  %7 = vst [vmem:[%s6] sm:$0xff] %v4

// kernel: tile.14
$region0: #{tile.14}
  %s0 = inlined_call_operand.vmem [shape: f32[16,8], index: 0, kind: input, shape index: {}]
  %s1 = inlined_call_operand.vmem [shape: f32[1,128], index: 1, kind: output, shape index: {}]
  $region1: #{tile.14} parent=0
    #allocation0 [shape = 'u8[4096]{0}', space=vmem, size = 0x1000, scoped, tag = 'scoped mem for output reshape']
    %v2 = vld [vmem:[%s0] sm:$0x1]
    %vm3 = vcmask 64512
    %4 = vst.msk [vmem:[#allocation0] sm:$0x1] %vm3, %v2
    %s5 = scalar_lea.vmem %s0, 15
    %v6 = vld [vmem:[%s5] sm:$0x1]
    %7 = vrot.lane.b32.xlu0 %v6, 120
    %v8 = vpop.permute.xlu0 %7
    %vm9 = vcmask 1048512
    %10 = vst.msk [vmem:[#allocation0] sm:$0x1] %vm9, %v8
    %s11 = scalar_lea.vmem %s0, 14
    %v12 = vld [vmem:[%s11] sm:$0x1]
    %13 = vrot.lane.b32.xlu0 %v12, 112
    %v14 = vpop.permute.xlu0 %13
    %vm15 = vcmask 982912
    %16 = vst.msk [vmem:[#allocation0] sm:$0x1] %vm15, %v14
    %s17 = scalar_lea.vmem %s0, 13
    %v18 = vld [vmem:[%s17] sm:$0x1]
    %19 = vrot.lane.b32.xlu0 %v18, 104
    %v20 = vpop.permute.xlu0 %19
    %vm21 = vcmask 917312
    %22 = vst.msk [vmem:[#allocation0] sm:$0x1] %vm21, %v20
    %s23 = scalar_lea.vmem %s0, 12
    %v24 = vld [vmem:[%s23] sm:$0x1]
    %25 = vrot.lane.b32.xlu0 %v24, 96
    %v26 = vpop.permute.xlu0 %25
    %vm27 = vcmask 851712
    %28 = vst.msk [vmem:[#allocation0] sm:$0x1] %vm27, %v26
    %s29 = scalar_lea.vmem %s0, 11
    %v30 = vld [vmem:[%s29] sm:$0x1]
    %31 = vrot.lane.b32.xlu0 %v30, 88
    %v32 = vpop.permute.xlu0 %31
    %vm33 = vcmask 786112
    %34 = vst.msk [vmem:[#allocation0] sm:$0x1] %vm33, %v32
    %s35 = scalar_lea.vmem %s0, 10
    %v36 = vld [vmem:[%s35] sm:$0x1]
    %37 = vrot.lane.b32.xlu0 %v36, 80
    %v38 = vpop.permute.xlu0 %37
    %vm39 = vcmask 720512
    %40 = vst.msk [vmem:[#allocation0] sm:$0x1] %vm39, %v38
    %s41 = scalar_lea.vmem %s0, 9
    %v42 = vld [vmem:[%s41] sm:$0x1]
    %43 = vrot.lane.b32.xlu0 %v42, 72
    %v44 = vpop.permute.xlu0 %43
    %vm45 = vcmask 654912
    %46 = vst.msk [vmem:[#allocation0] sm:$0x1] %vm45, %v44
    %s47 = scalar_lea.vmem %s0, 8
    %v48 = vld [vmem:[%s47] sm:$0x1]
    %49 = vrot.lane.b32.xlu0 %v48, 64
    %v50 = vpop.permute.xlu0 %49
    %vm51 = vcmask 589312
    %52 = vst.msk [vmem:[#allocation0] sm:$0x1] %vm51, %v50
    %s53 = scalar_lea.vmem %s0, 7
    %v54 = vld [vmem:[%s53] sm:$0x1]
    %55 = vrot.lane.b32.xlu0 %v54, 56
    %v56 = vpop.permute.xlu0 %55
    %vm57 = vcmask 523712
    %58 = vst.msk [vmem:[#allocation0] sm:$0x1] %vm57, %v56
    %s59 = scalar_lea.vmem %s0, 6
    %v60 = vld [vmem:[%s59] sm:$0x1]
    %61 = vrot.lane.b32.xlu0 %v60, 48
    %v62 = vpop.permute.xlu0 %61
    %vm63 = vcmask 458112
    %64 = vst.msk [vmem:[#allocation0] sm:$0x1] %vm63, %v62
    %s65 = scalar_lea.vmem %s0, 5
    %v66 = vld [vmem:[%s65] sm:$0x1]
    %67 = vrot.lane.b32.xlu0 %v66, 40
    %v68 = vpop.permute.xlu0 %67
    %vm69 = vcmask 392512
    %70 = vst.msk [vmem:[#allocation0] sm:$0x1] %vm69, %v68
    %s71 = scalar_lea.vmem %s0, 4
    %v72 = vld [vmem:[%s71] sm:$0x1]
    %73 = vrot.lane.b32.xlu0 %v72, 32
    %v74 = vpop.permute.xlu0 %73
    %vm75 = vcmask 326912
    %76 = vst.msk [vmem:[#allocation0] sm:$0x1] %vm75, %v74
    %s77 = scalar_lea.vmem %s0, 3
    %v78 = vld [vmem:[%s77] sm:$0x1]
    %79 = vrot.lane.b32.xlu0 %v78, 24
    %v80 = vpop.permute.xlu0 %79
    %vm81 = vcmask 261312
    %82 = vst.msk [vmem:[#allocation0] sm:$0x1] %vm81, %v80
    %s83 = scalar_lea.vmem %s0, 2
    %v84 = vld [vmem:[%s83] sm:$0x1]
    %85 = vrot.lane.b32.xlu0 %v84, 16
    %v86 = vpop.permute.xlu0 %85
    %vm87 = vcmask 195712
    %88 = vst.msk [vmem:[#allocation0] sm:$0x1] %vm87, %v86
    %s89 = scalar_lea.vmem %s0, 1
    %v90 = vld [vmem:[%s89] sm:$0x1]
    %91 = vrot.lane.b32.xlu0 %v90, 8
    %v92 = vpop.permute.xlu0 %91
    %vm93 = vcmask 130112
    %94 = vst.msk [vmem:[#allocation0] sm:$0x1] %vm93, %v92
    %s96 = sshllo.u32 0, 1
    %v98 = vld [vmem:[#allocation0] sm:%s96]
    %s99 = sshllo.u32 0, 1
    %100 = vst [vmem:[%s1] sm:%s99] %v98

// kernel: conv2d_double_block.3
$region0: #{conv2d_double_block.3}
  #allocation0 [shape = 'u32[]', space=smem, size = 0x4, offset = 0x4, fixed_abs, tag = 'smem constant byte address 0x4 - core index']
  #allocation1 [shape = 'u32[144,128]{1,0:T(1,128)}', space=vmem, size = 0x12000, scoped, tag = 'internal scratch']
  %s0 = inlined_call_operand.vmem [shape: f32[32,128], index: 0, kind: input, shape index: {}]
  %s1 = inlined_call_operand.vmem [shape: f32[1,128], index: 1, kind: input, shape index: {}]
  %s2 = inlined_call_operand.vmem [shape: f32[1,128], index: 2, kind: input, shape index: {}]
  %s3 = inlined_call_operand.vmem [shape: f32[32,128], index: 3, kind: output, shape index: {}]
  %s4 = sld [smem:[#allocation0]]
  $region22: #{conv2d_double_block.3} parent=0
    _
  %s6 = ssub.s32 1, %s4
  %s7 = scalar_select 0, %s6, %s4
  // Predicated region
  $region2: #{conv2d_double_block.3} parent=0 // pred_check
    _
  $region3: #{conv2d_double_block.3} parent=0 // pred_check_branch
    %9 = sbr.rel (0) target = $region5
  $region4: #{conv2d_double_block.3} parent=0 // pred_region
    _
  $region5: #{conv2d_double_block.3} parent=0 // pred_fallthru
    _
  // Predicated region
  $region6: #{conv2d_double_block.3} parent=0 // pred_check
    _
  $region7: #{conv2d_double_block.3} parent=0 // pred_check_branch
    %11 = sbr.rel (0) target = $region9
  $region8: #{conv2d_double_block.3} parent=0 // pred_region
    _
  $region9: #{conv2d_double_block.3} parent=0 // pred_fallthru
    _
  // Predicated region
  $region10: #{conv2d_double_block.3} parent=0 // pred_check
    _
  $region11: #{conv2d_double_block.3} parent=0 // pred_check_branch
    %13 = sbr.rel (0) target = $region13
  $region12: #{conv2d_double_block.3} parent=0 // pred_region
    _
  $region13: #{conv2d_double_block.3} parent=0 // pred_fallthru
    _
  %v14 = vld [vmem:[%s0] sm:$0xff]
  %v15 = vld [vmem:[%s0 + $0x8] sm:$0xff]
  %v16 = vld [vmem:[%s0 + $0x10] sm:$0xff]
  %v17 = vld [vmem:[%s0 + $0x18] sm:$0xff]
  %v18 = vld [vmem:[%s1] sm:$0x1]
  %v20 = vlaneseq
  %v21 = vshrl.u32 %v20, 7
  %v22 = vsub.s32 0, %v21
  %v23 = vrot.slane %v18, %v22
  %v25 = vmul.f32 %v14, %v23
  %v26 = vmul.f32 %v15, %v23
  %v27 = vmul.f32 %v16, %v23
  %v28 = vmul.f32 %v17, %v23
  %v29 = vld [vmem:[%s2] sm:$0x1]
  %v31 = vlaneseq
  %v32 = vshrl.u32 %v31, 7
  %v33 = vsub.s32 0, %v32
  %v34 = vrot.slane %v29, %v33
  %v36 = vadd.f32 %v25, %v34
  %v37 = vadd.f32 %v26, %v34
  %v38 = vadd.f32 %v27, %v34
  %v39 = vadd.f32 %v28, %v34
  %vm40 = vcmp.ge.f32.partialorder %v36, 0.0
  %vm41 = vcmp.ge.f32.partialorder %v37, 0.0
  %vm42 = vcmp.ge.f32.partialorder %v38, 0.0
  %vm43 = vcmp.ge.f32.partialorder %v39, 0.0
  %v44 = vmul.f32 %v36, 0.01
  %v45 = vmul.f32 %v37, 0.01
  %v46 = vmul.f32 %v38, 0.01
  %v47 = vmul.f32 %v39, 0.01
  %v48 = vsel %vm40, %v36, %v44
  %v49 = vsel %vm41, %v37, %v45
  %v50 = vsel %vm42, %v38, %v46
  %v51 = vsel %vm43, %v39, %v47
  %52 = vst [vmem:[%s3] sm:$0xff] %v48
  %53 = vst [vmem:[%s3 + $0x8] sm:$0xff] %v49
  %54 = vst [vmem:[%s3 + $0x10] sm:$0xff] %v50
  %55 = vst [vmem:[%s3 + $0x18] sm:$0xff] %v51
  // Predicated region
  $region14: #{conv2d_double_block.3} parent=0 // pred_check
    _
  $region15: #{conv2d_double_block.3} parent=0 // pred_check_branch
    %57 = sbr.rel (0) target = $region17
  $region16: #{conv2d_double_block.3} parent=0 // pred_region
    _
  $region17: #{conv2d_double_block.3} parent=0 // pred_fallthru
    _
  // Predicated region
  $region18: #{conv2d_double_block.3} parent=0 // pred_check
    _
  $region19: #{conv2d_double_block.3} parent=0 // pred_check_branch
    %59 = sbr.rel (0) target = $region21
  $region20: #{conv2d_double_block.3} parent=0 // pred_region
    _
  $region21: #{conv2d_double_block.3} parent=0 // pred_fallthru
    _

</llo_original>
